<compile_context>
chip_gen: v7x
topology: tpu7x:2x2x1
jax: 0.10.0
libtpu: 0.0.40
codegen_flags: <defaults>
</compile_context>

<pallas_src>
import functools

import jax
import jax.numpy as jnp
from jax.experimental import pallas as pl
from jax.experimental.pallas import tpu as pltpu

EPS = 1e-5


def deblock_kernel(x_ref, t1_ref, t2_ref,
                   g1_ref, be1_ref, g2_ref, be2_ref,
                   p_ref, pt_ref, out_ref, *, dsize):
    R, K = x_ref.shape            # R = N*D, K = H*W*C (lane-dense)
    C = p_ref.shape[1]
    inv_m = 1.0 / float(R * (K // C))     # 1 / (N*D*H*W)

    x = x_ref[...]                        # (R, K) f32: conv1 input + residual

    # D-boundary masks, shared by both convs: zero the rows whose d-1 / d+1
    # neighbour is outside the volume.  This also zeroes the roll wrap-around
    # rows and any row that would cross the N-batch boundary.
    d_idx = jax.lax.broadcasted_iota(jnp.int32, (R, K), 0) % dsize
    keep_m = d_idx != 0
    keep_p = d_idx != dsize - 1

    def conv(a, t_ref):
        # 3x3x3 conv as ONE MXU matmul: lane-concat of the three kd-shifted
        # slabs (R, 3K) against the kd-stacked HW block-Toeplitz factor (3K, K).
        # +/-1 shifts along D run on the XLU (pltpu.roll), not the MXU.
        a_m = jnp.where(keep_m, pltpu.roll(a, shift=1, axis=0), 0.0)
        a_p = jnp.where(keep_p, pltpu.roll(a, shift=R - 1, axis=0), 0.0)
        lhs = jnp.concatenate([a_m, a, a_p], axis=1).astype(jnp.bfloat16)
        return jnp.dot(lhs, t_ref[...], preferred_element_type=jnp.float32)

    def bn_relu(a, g_ref, be_ref):
        # training-mode BatchNorm3d, one-pass biased per-channel stats.
        # Stats pooling and scale/shift broadcast are each ONE batched dot.
        rs = jnp.sum(a, axis=0, keepdims=True)                 # (1, K)
        rs2 = jnp.sum(a * a, axis=0, keepdims=True)            # (1, K)
        stats = jnp.concatenate([rs, rs2], axis=0)             # (2, K)
        ch = jnp.dot(stats, p_ref[...],
                     preferred_element_type=jnp.float32) * inv_m   # (2, C)
        mean = ch[0:1, :]                                      # (1, C)
        var = ch[1:2, :] - mean * mean                         # (1, C)
        s_c = g_ref[...] * jax.lax.rsqrt(var + EPS)            # (1, C)
        t_c = be_ref[...] - mean * s_c                         # (1, C)
        st = jnp.concatenate([s_c, t_c], axis=0)               # (2, C)
        full = jnp.dot(st, pt_ref[...],
                       preferred_element_type=jnp.float32)     # (2, K)
        return jnp.maximum(a * full[0:1, :] + full[1:2, :], 0.0)

    h1 = bn_relu(conv(x, t1_ref), g1_ref, be1_ref)
    h2 = bn_relu(conv(h1, t2_ref), g2_ref, be2_ref)
    out_ref[...] = h2 + x


def _toeplitz_hw(w_dhwio, H, W, C):
    """Fold the kh/kw taps and the H/W zero-padding of a 3x3x3 conv into a
    kd-stacked dense (3*H*W*C, H*W*C) block-Toeplitz matrix (bf16)."""
    f32 = jnp.float32
    sh = jnp.stack([jnp.eye(H, H, k=1 - kh, dtype=f32) for kh in range(3)])
    sw = jnp.stack([jnp.eye(W, W, k=1 - kw, dtype=f32) for kw in range(3)])
    t = jnp.einsum('apq,buv,dabio->dpuiqvo', sh, sw, w_dhwio.astype(f32),
                   precision=jax.lax.Precision.HIGHEST)
    K = H * W * C
    return t.reshape(3 * K, K).astype(jnp.bfloat16)


def prepare_deblock_weights(params, shape):
    """One-time weight folding (call once; only depends on weights/shapes)."""
    N, D, H, W, C = shape
    w1, b1, g1, be1, w2, b2, g2, be2 = params
    del b1, b2   # conv bias is cancelled exactly by training-mode BN mean
    K = H * W * C
    t1 = _toeplitz_hw(w1, H, W, C)
    t2 = _toeplitz_hw(w2, H, W, C)
    pool = (jnp.arange(K)[:, None] % C ==
            jnp.arange(C)[None, :]).astype(jnp.float32)        # (K, C)
    vec = lambda v: v.reshape(1, C).astype(jnp.float32)
    return (t1, t2, vec(g1), vec(be1), vec(g2), vec(be2), pool, pool.T)


@functools.partial(jax.jit, static_argnames=("dsize",))
def _deblock_call(x_slab, t1, t2, g1, be1, g2, be2, pool, pool_t, *, dsize):
    R, K = x_slab.shape
    C = pool.shape[1]

    # VMEM budget guard: both bf16 Toeplitz factors must stay well under the
    # scoped VMEM limit (worst case v7x).  Beyond this, switch to the W-only
    # Toeplitz + row tiling (see TODO at top of file).
    assert 2 * (3 * K) * K * 2 <= 24 * 1024 * 1024, "Toeplitz factor too large"

    vmem = pl.BlockSpec(memory_space=pltpu.MemorySpace.VMEM)
    conv_flops = 2 * R * (3 * K) * K                 # one fused dot per conv
    bn_flops = 2 * 2 * K * C + 2 * 2 * C * K + 8 * R * K
    cost = pl.CostEstimate(
        flops=int(2 * (conv_flops + bn_flops) + 2 * R * K),
        transcendentals=int(2 * C),
        bytes_accessed=int(4 * (2 * R * K + 2 * K * C + 4 * C)
                           + 2 * (2 * 3 * K * K)))

    return pl.pallas_call(
        functools.partial(deblock_kernel, dsize=dsize),
        out_shape=jax.ShapeDtypeStruct((R, K), jnp.float32),
        in_specs=[vmem] * 9,
        out_specs=vmem,
        cost_estimate=cost,
    )(x_slab, t1, t2, g1, be1, g2, be2, pool, pool_t)


def deblock_pallas(x_ndhwc, params, prepared=None):
    """x_ndhwc: (N, D, H, W, C) float32. Returns same shape."""
    N, D, H, W, C = x_ndhwc.shape
    if prepared is None:
        prepared = prepare_deblock_weights(params, x_ndhwc.shape)
    x_slab = x_ndhwc.reshape(N * D, H * W * C).astype(jnp.float32)
    out_slab = _deblock_call(x_slab, *prepared, dsize=D)
    return out_slab.reshape(N, D, H, W, C)


def deblock_ref(x_ndhwc, params):
    """Pure-JAX reference (same NDHWC layout), PyTorch training-mode BN."""
    w1, b1, g1, be1, w2, b2, g2, be2 = params

    def conv(x, w, b):
        y = jax.lax.conv_general_dilated(
            x, w, window_strides=(1, 1, 1),
            padding=((1, 1), (1, 1), (1, 1)),
            dimension_numbers=('NDHWC', 'DHWIO', 'NDHWC'),
            precision=jax.lax.Precision.HIGHEST)
        return y + b

    def bn(y, g, be):
        mean = y.mean(axis=(0, 1, 2, 3), keepdims=True)
        var = ((y - mean) ** 2).mean(axis=(0, 1, 2, 3), keepdims=True)
        return g * (y - mean) / jnp.sqrt(var + EPS) + be

    h = jax.nn.relu(bn(conv(x_ndhwc, w1, b1), g1, be1))
    h = jax.nn.relu(bn(conv(h, w2, b2), g2, be2))
    return h + x_ndhwc


if __name__ == "__main__":
    key = jax.random.PRNGKey(0)
    N, C, D, H, W = 2, 4, 8, 8, 8
    keys = jax.random.split(key, 9)

    # input in PyTorch NCDHW convention
    x_ncdhw = jax.random.normal(keys[0], (N, C, D, H, W), jnp.float32)

    # Conv3d weights: PyTorch layout (Cout, Cin, kd, kh, kw) -> DHWIO
    w1_pt = 0.1 * jax.random.normal(keys[1], (C, C, 3, 3, 3), jnp.float32)
    w2_pt = 0.1 * jax.random.normal(keys[2], (C, C, 3, 3, 3), jnp.float32)
    w1 = jnp.transpose(w1_pt, (2, 3, 4, 1, 0))
    w2 = jnp.transpose(w2_pt, (2, 3, 4, 1, 0))
    b1 = 0.1 * jax.random.normal(keys[3], (C,), jnp.float32)
    b2 = 0.1 * jax.random.normal(keys[4], (C,), jnp.float32)
    g1 = 1.0 + 0.1 * jax.random.normal(keys[5], (C,), jnp.float32)
    g2 = 1.0 + 0.1 * jax.random.normal(keys[6], (C,), jnp.float32)
    be1 = 0.1 * jax.random.normal(keys[7], (C,), jnp.float32)
    be2 = 0.1 * jax.random.normal(keys[8], (C,), jnp.float32)
    params = (w1, b1, g1, be1, w2, b2, g2, be2)

    x = jnp.transpose(x_ncdhw, (0, 2, 3, 4, 1))   # NCDHW -> NDHWC

    # One-time weight preparation (hoisted out of the per-call path).
    prepared = jax.block_until_ready(
        prepare_deblock_weights(params, x.shape))

    out = jax.block_until_ready(deblock_pallas(x, params, prepared))
    ref = jax.block_until_ready(deblock_ref(x, params))

    assert out.shape == (N, D, H, W, C)
    assert float(jnp.max(jnp.abs(out - ref))) < 5e-2
    print("KERNEL_OK")
</pallas_src>

<mosaic_0001>
module attributes {stable_mosaic.version = 11 : i64} {
  func.func @deblock_kernel(%arg0: memref<16x256xf32, #tpu.memory_space<vmem>>, %arg1: memref<768x256xbf16, #tpu.memory_space<vmem>>, %arg2: memref<768x256xbf16, #tpu.memory_space<vmem>>, %arg3: memref<1x4xf32, #tpu.memory_space<vmem>>, %arg4: memref<1x4xf32, #tpu.memory_space<vmem>>, %arg5: memref<1x4xf32, #tpu.memory_space<vmem>>, %arg6: memref<1x4xf32, #tpu.memory_space<vmem>>, %arg7: memref<256x4xf32, #tpu.memory_space<vmem>>, %arg8: memref<4x256xf32, #tpu.memory_space<vmem>>, %arg9: memref<16x256xf32, #tpu.memory_space<vmem>>) attributes {dimension_semantics = [], scalar_prefetch = 0 : i64, scratch_operands = 0 : i64, tpu.core_type = #tpu.core_type<tc>} {
    %c0 = arith.constant 0 : index
    %c0_0 = arith.constant 0 : index
    %0 = vector.load %arg0[%c0, %c0_0] : memref<16x256xf32, #tpu.memory_space<vmem>>, vector<16x256xf32>
    %1 = tpu.iota {dimensions = array<i32: 0>} : vector<16x256xi32>
    %c8_i32 = arith.constant 8 : i32
    %c0_i32 = arith.constant 0 : i32
    %2 = arith.cmpi eq, %c8_i32, %c0_i32 : i32
    %c1_i32 = arith.constant 1 : i32
    %3 = arith.select %2, %c1_i32, %c8_i32 : i32
    %4 = vector.broadcast %3 : i32 to vector<16x256xi32>
    %5 = arith.remsi %1, %4 : vector<16x256xi32>
    %c0_i32_1 = arith.constant 0 : i32
    %6 = vector.broadcast %c0_i32_1 : i32 to vector<16x256xi32>
    %7 = arith.cmpi ne, %5, %6 : vector<16x256xi32>
    %c0_i32_2 = arith.constant 0 : i32
    %8 = vector.broadcast %c0_i32_2 : i32 to vector<16x256xi32>
    %9 = arith.cmpi slt, %5, %8 : vector<16x256xi32>
    %c0_i32_3 = arith.constant 0 : i32
    %10 = arith.cmpi slt, %3, %c0_i32_3 : i32
    %11 = vector.broadcast %10 : i1 to vector<16x256xi1>
    %12 = vector.broadcast %11 : vector<16x256xi1> to vector<16x256xi1>
    %13 = arith.xori %9, %12 : vector<16x256xi1>
    %14 = arith.andi %13, %7 : vector<16x256xi1>
    %15 = vector.broadcast %3 : i32 to vector<16x256xi32>
    %16 = arith.addi %5, %15 : vector<16x256xi32>
    %17 = arith.select %14, %16, %5 : vector<16x256xi1>, vector<16x256xi32>
    %c0_i32_4 = arith.constant 0 : i32
    %18 = vector.broadcast %c0_i32_4 : i32 to vector<16x256xi32>
    %19 = arith.cmpi ne, %17, %18 : vector<16x256xi32>
    %c7_i32 = arith.constant 7 : i32
    %20 = vector.broadcast %c7_i32 : i32 to vector<16x256xi32>
    %21 = arith.cmpi ne, %17, %20 : vector<16x256xi32>
    %c1_i32_5 = arith.constant 1 : i32
    %22 = tpu.dynamic_rotate %0 by %c1_i32_5 dim 0 : vector<16x256xf32>, i32 -> vector<16x256xf32>
    %cst = arith.constant 0.000000e+00 : f32
    %23 = vector.broadcast %cst : f32 to vector<16x256xf32>
    %24 = arith.select %19, %22, %23 : vector<16x256xi1>, vector<16x256xf32>
    %c15_i32 = arith.constant 15 : i32
    %25 = tpu.dynamic_rotate %0 by %c15_i32 dim 0 : vector<16x256xf32>, i32 -> vector<16x256xf32>
    %cst_6 = arith.constant 0.000000e+00 : f32
    %26 = vector.broadcast %cst_6 : f32 to vector<16x256xf32>
    %27 = arith.select %21, %25, %26 : vector<16x256xi1>, vector<16x256xf32>
    %28 = tpu.concatenate %24, %0, %27 in 1 : vector<16x256xf32>, vector<16x256xf32>, vector<16x256xf32> -> vector<16x768xf32>
    %29 = arith.truncf %28 : vector<16x768xf32> to vector<16x768xbf16>
    %c0_7 = arith.constant 0 : index
    %c0_8 = arith.constant 0 : index
    %30 = vector.load %arg1[%c0_7, %c0_8] : memref<768x256xbf16, #tpu.memory_space<vmem>>, vector<768x256xbf16>
    %cst_9 = arith.constant dense<0.000000e+00> : vector<16x256xf32>
    %31 = tpu.matmul %29, %30, %cst_9 {dimension_numbers = #tpu.dot_dimension_numbers<[1], [0], [0], [1], [0, 0, 1, 1], [], []>} : vector<16x768xbf16>, vector<768x256xbf16>, vector<16x256xf32> -> vector<16x256xf32>
    %cst_10 = arith.constant dense<0.000000e+00> : vector<256xf32>
    %32 = vector.multi_reduction <add>, %31, %cst_10 [0] : vector<16x256xf32> to vector<256xf32>
    %33 = vector.shape_cast %32 : vector<256xf32> to vector<1x256xf32>
    %34 = arith.mulf %31, %31 : vector<16x256xf32>
    %cst_11 = arith.constant dense<0.000000e+00> : vector<256xf32>
    %35 = vector.multi_reduction <add>, %34, %cst_11 [0] : vector<16x256xf32> to vector<256xf32>
    %36 = vector.shape_cast %35 : vector<256xf32> to vector<1x256xf32>
    %37 = tpu.concatenate %33, %36 in 0 : vector<1x256xf32>, vector<1x256xf32> -> vector<2x256xf32>
    %c0_12 = arith.constant 0 : index
    %c0_13 = arith.constant 0 : index
    %38 = vector.load %arg7[%c0_12, %c0_13] : memref<256x4xf32, #tpu.memory_space<vmem>>, vector<256x4xf32>
    %cst_14 = arith.constant dense<0.000000e+00> : vector<2x4xf32>
    %39 = tpu.matmul %37, %38, %cst_14 {dimension_numbers = #tpu.dot_dimension_numbers<[1], [0], [0], [1], [0, 0, 1, 1], [], []>} : vector<2x256xf32>, vector<256x4xf32>, vector<2x4xf32> -> vector<2x4xf32>
    %cst_15 = arith.constant 9.765625E-4 : f32
    %40 = vector.broadcast %cst_15 : f32 to vector<2x4xf32>
    %41 = arith.mulf %39, %40 : vector<2x4xf32>
    %42 = vector.extract_strided_slice %41 {offsets = [0, 0], sizes = [1, 4], strides = [1, 1]} : vector<2x4xf32> to vector<1x4xf32>
    %43 = vector.extract_strided_slice %41 {offsets = [1, 0], sizes = [1, 4], strides = [1, 1]} : vector<2x4xf32> to vector<1x4xf32>
    %44 = arith.mulf %42, %42 : vector<1x4xf32>
    %45 = arith.subf %43, %44 : vector<1x4xf32>
    %c0_16 = arith.constant 0 : index
    %c0_17 = arith.constant 0 : index
    %46 = vector.load %arg3[%c0_16, %c0_17] : memref<1x4xf32, #tpu.memory_space<vmem>>, vector<1x4xf32>
    %cst_18 = arith.constant 9.99999974E-6 : f32
    %47 = vector.broadcast %cst_18 : f32 to vector<1x4xf32>
    %48 = arith.addf %45, %47 : vector<1x4xf32>
    %49 = math.rsqrt %48 : vector<1x4xf32>
    %50 = arith.mulf %46, %49 : vector<1x4xf32>
    %c0_19 = arith.constant 0 : index
    %c0_20 = arith.constant 0 : index
    %51 = vector.load %arg4[%c0_19, %c0_20] : memref<1x4xf32, #tpu.memory_space<vmem>>, vector<1x4xf32>
    %52 = arith.mulf %42, %50 : vector<1x4xf32>
    %53 = arith.subf %51, %52 : vector<1x4xf32>
    %54 = tpu.concatenate %50, %53 in 0 : vector<1x4xf32>, vector<1x4xf32> -> vector<2x4xf32>
    %c0_21 = arith.constant 0 : index
    %c0_22 = arith.constant 0 : index
    %55 = vector.load %arg8[%c0_21, %c0_22] : memref<4x256xf32, #tpu.memory_space<vmem>>, vector<4x256xf32>
    %cst_23 = arith.constant dense<0.000000e+00> : vector<2x256xf32>
    %56 = tpu.matmul %54, %55, %cst_23 {dimension_numbers = #tpu.dot_dimension_numbers<[1], [0], [0], [1], [0, 0, 1, 1], [], []>} : vector<2x4xf32>, vector<4x256xf32>, vector<2x256xf32> -> vector<2x256xf32>
    %57 = vector.extract_strided_slice %56 {offsets = [0, 0], sizes = [1, 256], strides = [1, 1]} : vector<2x256xf32> to vector<1x256xf32>
    %58 = vector.broadcast %57 : vector<1x256xf32> to vector<16x256xf32>
    %59 = arith.mulf %31, %58 : vector<16x256xf32>
    %60 = vector.extract_strided_slice %56 {offsets = [1, 0], sizes = [1, 256], strides = [1, 1]} : vector<2x256xf32> to vector<1x256xf32>
    %61 = vector.broadcast %60 : vector<1x256xf32> to vector<16x256xf32>
    %62 = arith.addf %59, %61 : vector<16x256xf32>
    %cst_24 = arith.constant 0.000000e+00 : f32
    %63 = vector.broadcast %cst_24 : f32 to vector<16x256xf32>
    %64 = arith.maximumf %62, %63 : vector<16x256xf32>
    %c1_i32_25 = arith.constant 1 : i32
    %65 = tpu.dynamic_rotate %64 by %c1_i32_25 dim 0 : vector<16x256xf32>, i32 -> vector<16x256xf32>
    %cst_26 = arith.constant 0.000000e+00 : f32
    %66 = vector.broadcast %cst_26 : f32 to vector<16x256xf32>
    %67 = arith.select %19, %65, %66 : vector<16x256xi1>, vector<16x256xf32>
    %c15_i32_27 = arith.constant 15 : i32
    %68 = tpu.dynamic_rotate %64 by %c15_i32_27 dim 0 : vector<16x256xf32>, i32 -> vector<16x256xf32>
    %cst_28 = arith.constant 0.000000e+00 : f32
    %69 = vector.broadcast %cst_28 : f32 to vector<16x256xf32>
    %70 = arith.select %21, %68, %69 : vector<16x256xi1>, vector<16x256xf32>
    %71 = tpu.concatenate %67, %64, %70 in 1 : vector<16x256xf32>, vector<16x256xf32>, vector<16x256xf32> -> vector<16x768xf32>
    %72 = arith.truncf %71 : vector<16x768xf32> to vector<16x768xbf16>
    %c0_29 = arith.constant 0 : index
    %c0_30 = arith.constant 0 : index
    %73 = vector.load %arg2[%c0_29, %c0_30] : memref<768x256xbf16, #tpu.memory_space<vmem>>, vector<768x256xbf16>
    %cst_31 = arith.constant dense<0.000000e+00> : vector<16x256xf32>
    %74 = tpu.matmul %72, %73, %cst_31 {dimension_numbers = #tpu.dot_dimension_numbers<[1], [0], [0], [1], [0, 0, 1, 1], [], []>} : vector<16x768xbf16>, vector<768x256xbf16>, vector<16x256xf32> -> vector<16x256xf32>
    %cst_32 = arith.constant dense<0.000000e+00> : vector<256xf32>
    %75 = vector.multi_reduction <add>, %74, %cst_32 [0] : vector<16x256xf32> to vector<256xf32>
    %76 = vector.shape_cast %75 : vector<256xf32> to vector<1x256xf32>
    %77 = arith.mulf %74, %74 : vector<16x256xf32>
    %cst_33 = arith.constant dense<0.000000e+00> : vector<256xf32>
    %78 = vector.multi_reduction <add>, %77, %cst_33 [0] : vector<16x256xf32> to vector<256xf32>
    %79 = vector.shape_cast %78 : vector<256xf32> to vector<1x256xf32>
    %80 = tpu.concatenate %76, %79 in 0 : vector<1x256xf32>, vector<1x256xf32> -> vector<2x256xf32>
    %c0_34 = arith.constant 0 : index
    %c0_35 = arith.constant 0 : index
    %81 = vector.load %arg7[%c0_34, %c0_35] : memref<256x4xf32, #tpu.memory_space<vmem>>, vector<256x4xf32>
    %cst_36 = arith.constant dense<0.000000e+00> : vector<2x4xf32>
    %82 = tpu.matmul %80, %81, %cst_36 {dimension_numbers = #tpu.dot_dimension_numbers<[1], [0], [0], [1], [0, 0, 1, 1], [], []>} : vector<2x256xf32>, vector<256x4xf32>, vector<2x4xf32> -> vector<2x4xf32>
    %cst_37 = arith.constant 9.765625E-4 : f32
    %83 = vector.broadcast %cst_37 : f32 to vector<2x4xf32>
    %84 = arith.mulf %82, %83 : vector<2x4xf32>
    %85 = vector.extract_strided_slice %84 {offsets = [0, 0], sizes = [1, 4], strides = [1, 1]} : vector<2x4xf32> to vector<1x4xf32>
    %86 = vector.extract_strided_slice %84 {offsets = [1, 0], sizes = [1, 4], strides = [1, 1]} : vector<2x4xf32> to vector<1x4xf32>
    %87 = arith.mulf %85, %85 : vector<1x4xf32>
    %88 = arith.subf %86, %87 : vector<1x4xf32>
    %c0_38 = arith.constant 0 : index
    %c0_39 = arith.constant 0 : index
    %89 = vector.load %arg5[%c0_38, %c0_39] : memref<1x4xf32, #tpu.memory_space<vmem>>, vector<1x4xf32>
    %cst_40 = arith.constant 9.99999974E-6 : f32
    %90 = vector.broadcast %cst_40 : f32 to vector<1x4xf32>
    %91 = arith.addf %88, %90 : vector<1x4xf32>
    %92 = math.rsqrt %91 : vector<1x4xf32>
    %93 = arith.mulf %89, %92 : vector<1x4xf32>
    %c0_41 = arith.constant 0 : index
    %c0_42 = arith.constant 0 : index
    %94 = vector.load %arg6[%c0_41, %c0_42] : memref<1x4xf32, #tpu.memory_space<vmem>>, vector<1x4xf32>
    %95 = arith.mulf %85, %93 : vector<1x4xf32>
    %96 = arith.subf %94, %95 : vector<1x4xf32>
    %97 = tpu.concatenate %93, %96 in 0 : vector<1x4xf32>, vector<1x4xf32> -> vector<2x4xf32>
    %c0_43 = arith.constant 0 : index
    %c0_44 = arith.constant 0 : index
    %98 = vector.load %arg8[%c0_43, %c0_44] : memref<4x256xf32, #tpu.memory_space<vmem>>, vector<4x256xf32>
    %cst_45 = arith.constant dense<0.000000e+00> : vector<2x256xf32>
    %99 = tpu.matmul %97, %98, %cst_45 {dimension_numbers = #tpu.dot_dimension_numbers<[1], [0], [0], [1], [0, 0, 1, 1], [], []>} : vector<2x4xf32>, vector<4x256xf32>, vector<2x256xf32> -> vector<2x256xf32>
    %100 = vector.extract_strided_slice %99 {offsets = [0, 0], sizes = [1, 256], strides = [1, 1]} : vector<2x256xf32> to vector<1x256xf32>
    %101 = vector.broadcast %100 : vector<1x256xf32> to vector<16x256xf32>
    %102 = arith.mulf %74, %101 : vector<16x256xf32>
    %103 = vector.extract_strided_slice %99 {offsets = [1, 0], sizes = [1, 256], strides = [1, 1]} : vector<2x256xf32> to vector<1x256xf32>
    %104 = vector.broadcast %103 : vector<1x256xf32> to vector<16x256xf32>
    %105 = arith.addf %102, %104 : vector<16x256xf32>
    %cst_46 = arith.constant 0.000000e+00 : f32
    %106 = vector.broadcast %cst_46 : f32 to vector<16x256xf32>
    %107 = arith.maximumf %105, %106 : vector<16x256xf32>
    %108 = arith.addf %107, %0 : vector<16x256xf32>
    %c0_47 = arith.constant 0 : index
    %c0_48 = arith.constant 0 : index
    %109 = vector.load %arg9[%c0_47, %c0_48] : memref<16x256xf32, #tpu.memory_space<vmem>>, vector<16x256xf32>
    tpu.vector_store %arg9[%c0_47, %c0_48], %108 {strides = array<i32>} : memref<16x256xf32, #tpu.memory_space<vmem>>, vector<16x256xf32>,
    return
  }
}

</mosaic_0001>

<llo_original>
// kernel: _deblock_call.1
$region0: #{_deblock_call.1}
  #allocation0 [shape = 'u32[]', space=smem, size = 0x4, offset = 0x4, fixed_abs, tag = 'smem constant byte address 0x4 - core index']
  #allocation1 [shape = 'u32[144,128]{1,0:T(1,128)}', space=vmem, size = 0x12000, scoped, tag = 'internal scratch']
  %s0 = inlined_call_operand.vmem [shape: f32[16,256], index: 0, kind: input, shape index: {}]
  %s1 = inlined_call_operand.hbm [shape: bf16[768,256], index: 1, kind: input, shape index: {}]
  %s2 = inlined_call_operand.hbm [shape: bf16[768,256], index: 2, kind: input, shape index: {}]
  %s3 = inlined_call_operand.vmem [shape: f32[1,4], index: 3, kind: input, shape index: {}]
  %s4 = inlined_call_operand.vmem [shape: f32[1,4], index: 4, kind: input, shape index: {}]
  %s5 = inlined_call_operand.vmem [shape: f32[1,4], index: 5, kind: input, shape index: {}]
  %s6 = inlined_call_operand.vmem [shape: f32[1,4], index: 6, kind: input, shape index: {}]
  %s7 = inlined_call_operand.vmem [shape: f32[256,4], index: 7, kind: input, shape index: {}]
  %s8 = inlined_call_operand.vmem [shape: f32[4,256], index: 8, kind: input, shape index: {}]
  %s9 = inlined_call_operand.hbm [shape: f32[16,256], index: 9, kind: output, shape index: {}]
  %s10 = sld [smem:[#allocation0]]
  $region54: #{_deblock_call.1} parent=0
    _
  %s12 = ssub.s32 1, %s10
  %s13 = scalar_select 0, %s12, %s10
  $region1: #{_deblock_call.1} parent=0
    #allocation2 [shape = 'u8[393216]{0}', space=vmem, size = 0x60000, scoped, tag = 'input window, operand 1, single buffered']
    #allocation3 [shape = 's32[1]{0}', space=sflag, size = 0x4, scoped, tag = 'scoped memory for _deblock_call.1']
    #allocation4 [shape = 's32[1]{0}', space=sflag, size = 0x4, scoped, tag = 'scoped memory for _deblock_call.1']
    #allocation5 [shape = 'u8[393216]{0}', space=vmem, size = 0x60000, scoped, tag = 'input window, operand 2, single buffered']
    #allocation6 [shape = 's32[1]{0}', space=sflag, size = 0x4, scoped, tag = 'scoped memory for _deblock_call.1']
    #allocation7 [shape = 'u8[16384]{0}', space=vmem, size = 0x4000, scoped, tag = 'output window, operand 0, single buffered']
    %14 = vsyncpa [#allocation3], 0
    %15 = vsyncpa [#allocation6], 0
    %16 = vsyncpa [#allocation4], 0
    // Predicated region
    $region2: #{_deblock_call.1} parent=1 // pred_check
      _
    $region3: #{_deblock_call.1} parent=1 // pred_check_branch
      %18 = sbr.rel (0) target = $region5
    $region4: #{_deblock_call.1} parent=1 // pred_region
      _
    $region5: #{_deblock_call.1} parent=1 // pred_fallthru
      _
    // Predicated region
    $region6: #{_deblock_call.1} parent=1 // pred_check
      _
    $region7: #{_deblock_call.1} parent=1 // pred_check_branch
      %20 = sbr.rel (0) target = $region9
    $region8: #{_deblock_call.1} parent=1 // pred_region
      %s22 = ssub.s32 12288, 12288
      %23 = vsyncadd [#allocation3], %s22
      %s24 = sshll.u32 [#allocation2], 4
      %s25 = int_to_ptr.vmem [resolvable:$true] %s24
      %30 = dma.hbm_to_vmem [thread:$0]  %s1, 12288, %s25, [#allocation3], 128, 128, 8
    $region9: #{_deblock_call.1} parent=1 // pred_fallthru
      _
    // Predicated region
    $region10: #{_deblock_call.1} parent=1 // pred_check
      _
    $region11: #{_deblock_call.1} parent=1 // pred_check_branch
      %32 = sbr.rel (0) target = $region13
    $region12: #{_deblock_call.1} parent=1 // pred_region
      %s34 = ssub.s32 12288, 12288
      %35 = vsyncadd [#allocation6], %s34
      %s36 = sshll.u32 [#allocation5], 4
      %s37 = int_to_ptr.vmem [resolvable:$true] %s36
      %42 = dma.hbm_to_vmem [thread:$0]  %s2, 12288, %s37, [#allocation6], 128, 128, 8
    $region13: #{_deblock_call.1} parent=1 // pred_fallthru
      _
    // Predicated region
    $region14: #{_deblock_call.1} parent=1 // pred_check
      _
    $region15: #{_deblock_call.1} parent=1 // pred_check_branch
      %44 = sbr.rel (0) target = $region17
    $region16: #{_deblock_call.1} parent=1 // pred_region
      _
    $region17: #{_deblock_call.1} parent=1 // pred_fallthru
      _
    // Predicated region
    $region18: #{_deblock_call.1} parent=1 // pred_check
      _
    $region19: #{_deblock_call.1} parent=1 // pred_check_branch
      %46 = sbr.rel (0) target = $region21
    $region20: #{_deblock_call.1} parent=1 // pred_region
      _
    $region21: #{_deblock_call.1} parent=1 // pred_fallthru
      _
    // Predicated region
    $region22: #{_deblock_call.1} parent=1 // pred_check
      _
    $region23: #{_deblock_call.1} parent=1 // pred_check_branch
      %48 = sbr.rel (0) target = $region25
    $region24: #{_deblock_call.1} parent=1 // pred_region
      _
    $region25: #{_deblock_call.1} parent=1 // pred_fallthru
      _
    // Predicated region
    $region26: #{_deblock_call.1} parent=1 // pred_check
      _
    $region27: #{_deblock_call.1} parent=1 // pred_check_branch
      %50 = sbr.rel (0) target = $region29
    $region28: #{_deblock_call.1} parent=1 // pred_region
      _
    $region29: #{_deblock_call.1} parent=1 // pred_fallthru
      _
    // Predicated region
    $region30: #{_deblock_call.1} parent=1 // pred_check
      _
    $region31: #{_deblock_call.1} parent=1 // pred_check_branch
      %52 = sbr.rel (0) target = $region33
    $region32: #{_deblock_call.1} parent=1 // pred_region
      _
    $region33: #{_deblock_call.1} parent=1 // pred_fallthru
      _
    // Predicated region
    $region34: #{_deblock_call.1} parent=1 // pred_check
      _
    $region35: #{_deblock_call.1} parent=1 // pred_check_branch
      %54 = sbr.rel (0) target = $region37
    $region36: #{_deblock_call.1} parent=1 // pred_region
      _
    $region37: #{_deblock_call.1} parent=1 // pred_fallthru
      _
    // Predicated region
    $region38: #{_deblock_call.1} parent=1 // pred_check
      _
    $region39: #{_deblock_call.1} parent=1 // pred_check_branch
      %56 = sbr.rel (0) target = $region41
    $region40: #{_deblock_call.1} parent=1 // pred_region
      %57 = dma.done [#allocation3], 12288
    $region41: #{_deblock_call.1} parent=1 // pred_fallthru
      _
    // Predicated region
    $region42: #{_deblock_call.1} parent=1 // pred_check
      _
    $region43: #{_deblock_call.1} parent=1 // pred_check_branch
      %59 = sbr.rel (0) target = $region45
    $region44: #{_deblock_call.1} parent=1 // pred_region
      %60 = dma.done [#allocation6], 12288
    $region45: #{_deblock_call.1} parent=1 // pred_fallthru
      _
    %v61 = vld [vmem:[%s0] sm:$0xff]
    %v62 = vld [vmem:[%s0 + $0x8] sm:$0xff]
    %v63 = vld [vmem:[%s0 + $0x10] sm:$0xff]
    %v64 = vld [vmem:[%s0 + $0x18] sm:$0xff]
    %v65 = vlaneseq
    %v66 = vshrl.u32 %v65, 7
    %v67 = vadd.s32 %v66, 8
    %vm68 = vcmp.lt.s32.totalorder %v66, 0
    %v69 = vsub.s32 0, %v66
    %v70 = vsel %vm68, %v69, %v66
    %v71 = vshrl.u32 %v70, 3
    %v72 = vand.u32 %v70, 7
    %v73 = vsub.s32 0, %v72
    %v74 = vsel %vm68, %v73, %v72
    %vm75 = vcmp.lt.s32.totalorder %v67, 0
    %v76 = vsub.s32 0, %v67
    %v77 = vsel %vm75, %v76, %v67
    %v78 = vshrl.u32 %v77, 3
    %v79 = vand.u32 %v77, 7
    %v80 = vsub.s32 0, %v79
    %v81 = vsel %vm75, %v80, %v79
    %vm82 = vcmp.ne.s32.totalorder %v74, 0
    %vm83 = vcmp.ne.s32.totalorder %v81, 0
    %vm84 = vcmp.lt.s32.totalorder %v74, 0
    %vm85 = vcmp.lt.s32.totalorder %v81, 0
    %vm86 = vmand %vm84, %vm82
    %vm87 = vmand %vm85, %vm83
    %v88 = vadd.s32 %v74, 8
    %v89 = vadd.s32 %v81, 8
    %v90 = vsel %vm86, %v88, %v74
    %v91 = vsel %vm87, %v89, %v81
    %vm92 = vcmp.ne.s32.totalorder %v90, 0
    %vm93 = vcmp.ne.s32.totalorder %v91, 0
    %vm94 = vcmp.ne.s32.totalorder %v90, 7
    %vm95 = vcmp.ne.s32.totalorder %v91, 7
    %v96 = vrot.slane %v61, 7
    %v97 = vrot.slane %v62, 7
    %v98 = vrot.slane %v63, 7
    %v99 = vrot.slane %v64, 7
    %vm100 = vcmp.lt.s32.totalorder %v66, 1
    %v101 = vsel %vm100, %v96, %v98
    %v102 = vsel %vm100, %v97, %v99
    %v103 = vsel %vm100, %v98, %v96
    %v104 = vsel %vm100, %v99, %v97
    %v105 = vsel %vm92, %v103, 0.0
    %v106 = vsel %vm92, %v104, 0.0
    %v107 = vsel %vm93, %v101, 0.0
    %v108 = vsel %vm93, %v102, 0.0
    %v109 = vrot.slane %v61, 1
    %v110 = vrot.slane %v62, 1
    %v111 = vrot.slane %v63, 1
    %v112 = vrot.slane %v64, 1
    %vm113 = vcmp.lt.s32.totalorder %v66, 7
    %v114 = vsel %vm113, %v109, %v111
    %v115 = vsel %vm113, %v110, %v112
    %v116 = vsel %vm113, %v111, %v109
    %v117 = vsel %vm113, %v112, %v110
    %v118 = vsel %vm94, %v114, 0.0
    %v119 = vsel %vm94, %v115, 0.0
    %v120 = vsel %vm95, %v116, 0.0
    %v121 = vsel %vm95, %v117, 0.0
    %v122 = vpack.c.bf16 %v107, %v105
    %v123 = vpack.c.bf16 %v108, %v106
    %v124 = vpack.c.bf16 %v63, %v61
    %v125 = vpack.c.bf16 %v64, %v62
    %v126 = vpack.c.bf16 %v120, %v118
    %v127 = vpack.c.bf16 %v121, %v119
    %v128 = vld [vmem:[#allocation2] sm:$0xff]
    %v129 = vld [vmem:[#allocation2 + $0x8] sm:$0xff]
    %v130 = vld [vmem:[#allocation2 + $0x10] sm:$0xff]
    %v131 = vld [vmem:[#allocation2 + $0x18] sm:$0xff]
    %v132 = vld [vmem:[#allocation2 + $0x20] sm:$0xff]
    %v133 = vld [vmem:[#allocation2 + $0x28] sm:$0xff]
    %v134 = vld [vmem:[#allocation2 + $0x30] sm:$0xff]
    %v135 = vld [vmem:[#allocation2 + $0x38] sm:$0xff]
    %v136 = vld [vmem:[#allocation2 + $0x40] sm:$0xff]
    %v137 = vld [vmem:[#allocation2 + $0x48] sm:$0xff]
    %v138 = vld [vmem:[#allocation2 + $0x50] sm:$0xff]
    %v139 = vld [vmem:[#allocation2 + $0x58] sm:$0xff]
    %v140 = vld [vmem:[#allocation2 + $0x60] sm:$0xff]
    %v141 = vld [vmem:[#allocation2 + $0x68] sm:$0xff]
    %v142 = vld [vmem:[#allocation2 + $0x70] sm:$0xff]
    %v143 = vld [vmem:[#allocation2 + $0x78] sm:$0xff]
    %v144 = vld [vmem:[#allocation2 + $0x80] sm:$0xff]
    %v145 = vld [vmem:[#allocation2 + $0x88] sm:$0xff]
    %v146 = vld [vmem:[#allocation2 + $0x90] sm:$0xff]
    %v147 = vld [vmem:[#allocation2 + $0x98] sm:$0xff]
    %v148 = vld [vmem:[#allocation2 + $0xa0] sm:$0xff]
    %v149 = vld [vmem:[#allocation2 + $0xa8] sm:$0xff]
    %v150 = vld [vmem:[#allocation2 + $0xb0] sm:$0xff]
    %v151 = vld [vmem:[#allocation2 + $0xb8] sm:$0xff]
    %v152 = vld [vmem:[#allocation2 + $0xc0] sm:$0xff]
    %v153 = vld [vmem:[#allocation2 + $0xc8] sm:$0xff]
    %v154 = vld [vmem:[#allocation2 + $0xd0] sm:$0xff]
    %v155 = vld [vmem:[#allocation2 + $0xd8] sm:$0xff]
    %v156 = vld [vmem:[#allocation2 + $0xe0] sm:$0xff]
    %v157 = vld [vmem:[#allocation2 + $0xe8] sm:$0xff]
    %v158 = vld [vmem:[#allocation2 + $0xf0] sm:$0xff]
    %v159 = vld [vmem:[#allocation2 + $0xf8] sm:$0xff]
    %v160 = vld [vmem:[#allocation2 + $0x100] sm:$0xff]
    %v161 = vld [vmem:[#allocation2 + $0x108] sm:$0xff]
    %v162 = vld [vmem:[#allocation2 + $0x110] sm:$0xff]
    %v163 = vld [vmem:[#allocation2 + $0x118] sm:$0xff]
    %v164 = vld [vmem:[#allocation2 + $0x120] sm:$0xff]
    %v165 = vld [vmem:[#allocation2 + $0x128] sm:$0xff]
    %v166 = vld [vmem:[#allocation2 + $0x130] sm:$0xff]
    %v167 = vld [vmem:[#allocation2 + $0x138] sm:$0xff]
    %v168 = vld [vmem:[#allocation2 + $0x140] sm:$0xff]
    %v169 = vld [vmem:[#allocation2 + $0x148] sm:$0xff]
    %v170 = vld [vmem:[#allocation2 + $0x150] sm:$0xff]
    %v171 = vld [vmem:[#allocation2 + $0x158] sm:$0xff]
    %v172 = vld [vmem:[#allocation2 + $0x160] sm:$0xff]
    %v173 = vld [vmem:[#allocation2 + $0x168] sm:$0xff]
    %v174 = vld [vmem:[#allocation2 + $0x170] sm:$0xff]
    %v175 = vld [vmem:[#allocation2 + $0x178] sm:$0xff]
    %v176 = vld [vmem:[#allocation2 + $0x180] sm:$0xff]
    %v177 = vld [vmem:[#allocation2 + $0x188] sm:$0xff]
    %v178 = vld [vmem:[#allocation2 + $0x190] sm:$0xff]
    %v179 = vld [vmem:[#allocation2 + $0x198] sm:$0xff]
    %v180 = vld [vmem:[#allocation2 + $0x1a0] sm:$0xff]
    %v181 = vld [vmem:[#allocation2 + $0x1a8] sm:$0xff]
    %v182 = vld [vmem:[#allocation2 + $0x1b0] sm:$0xff]
    %v183 = vld [vmem:[#allocation2 + $0x1b8] sm:$0xff]
    %v184 = vld [vmem:[#allocation2 + $0x1c0] sm:$0xff]
    %v185 = vld [vmem:[#allocation2 + $0x1c8] sm:$0xff]
    %v186 = vld [vmem:[#allocation2 + $0x1d0] sm:$0xff]
    %v187 = vld [vmem:[#allocation2 + $0x1d8] sm:$0xff]
    %v188 = vld [vmem:[#allocation2 + $0x1e0] sm:$0xff]
    %v189 = vld [vmem:[#allocation2 + $0x1e8] sm:$0xff]
    %v190 = vld [vmem:[#allocation2 + $0x1f0] sm:$0xff]
    %v191 = vld [vmem:[#allocation2 + $0x1f8] sm:$0xff]
    %v192 = vld [vmem:[#allocation2 + $0x200] sm:$0xff]
    %v193 = vld [vmem:[#allocation2 + $0x208] sm:$0xff]
    %v194 = vld [vmem:[#allocation2 + $0x210] sm:$0xff]
    %v195 = vld [vmem:[#allocation2 + $0x218] sm:$0xff]
    %v196 = vld [vmem:[#allocation2 + $0x220] sm:$0xff]
    %v197 = vld [vmem:[#allocation2 + $0x228] sm:$0xff]
    %v198 = vld [vmem:[#allocation2 + $0x230] sm:$0xff]
    %v199 = vld [vmem:[#allocation2 + $0x238] sm:$0xff]
    %v200 = vld [vmem:[#allocation2 + $0x240] sm:$0xff]
    %v201 = vld [vmem:[#allocation2 + $0x248] sm:$0xff]
    %v202 = vld [vmem:[#allocation2 + $0x250] sm:$0xff]
    %v203 = vld [vmem:[#allocation2 + $0x258] sm:$0xff]
    %v204 = vld [vmem:[#allocation2 + $0x260] sm:$0xff]
    %v205 = vld [vmem:[#allocation2 + $0x268] sm:$0xff]
    %v206 = vld [vmem:[#allocation2 + $0x270] sm:$0xff]
    %v207 = vld [vmem:[#allocation2 + $0x278] sm:$0xff]
    %v208 = vld [vmem:[#allocation2 + $0x280] sm:$0xff]
    %v209 = vld [vmem:[#allocation2 + $0x288] sm:$0xff]
    %v210 = vld [vmem:[#allocation2 + $0x290] sm:$0xff]
    %v211 = vld [vmem:[#allocation2 + $0x298] sm:$0xff]
    %v212 = vld [vmem:[#allocation2 + $0x2a0] sm:$0xff]
    %v213 = vld [vmem:[#allocation2 + $0x2a8] sm:$0xff]
    %v214 = vld [vmem:[#allocation2 + $0x2b0] sm:$0xff]
    %v215 = vld [vmem:[#allocation2 + $0x2b8] sm:$0xff]
    %v216 = vld [vmem:[#allocation2 + $0x2c0] sm:$0xff]
    %v217 = vld [vmem:[#allocation2 + $0x2c8] sm:$0xff]
    %v218 = vld [vmem:[#allocation2 + $0x2d0] sm:$0xff]
    %v219 = vld [vmem:[#allocation2 + $0x2d8] sm:$0xff]
    %v220 = vld [vmem:[#allocation2 + $0x2e0] sm:$0xff]
    %v221 = vld [vmem:[#allocation2 + $0x2e8] sm:$0xff]
    %v222 = vld [vmem:[#allocation2 + $0x2f0] sm:$0xff]
    %v223 = vld [vmem:[#allocation2 + $0x2f8] sm:$0xff]
    %v320 = vunpack.c.l.b16 %v128
    %v321 = vunpack.c.h.b16 %v128
    %v322 = vunpack.c.l.b16 %v129
    %v323 = vunpack.c.h.b16 %v129
    %v324 = vunpack.c.l.b16 %v130
    %v325 = vunpack.c.h.b16 %v130
    %v326 = vunpack.c.l.b16 %v131
    %v327 = vunpack.c.h.b16 %v131
    %v328 = vunpack.c.l.b16 %v132
    %v329 = vunpack.c.h.b16 %v132
    %v330 = vunpack.c.l.b16 %v133
    %v331 = vunpack.c.h.b16 %v133
    %v332 = vunpack.c.l.b16 %v134
    %v333 = vunpack.c.h.b16 %v134
    %v334 = vunpack.c.l.b16 %v135
    %v335 = vunpack.c.h.b16 %v135
    %v336 = vunpack.c.l.b16 %v136
    %v337 = vunpack.c.h.b16 %v136
    %v338 = vunpack.c.l.b16 %v137
    %v339 = vunpack.c.h.b16 %v137
    %v340 = vunpack.c.l.b16 %v138
    %v341 = vunpack.c.h.b16 %v138
    %v342 = vunpack.c.l.b16 %v139
    %v343 = vunpack.c.h.b16 %v139
    %v344 = vunpack.c.l.b16 %v140
    %v345 = vunpack.c.h.b16 %v140
    %v346 = vunpack.c.l.b16 %v141
    %v347 = vunpack.c.h.b16 %v141
    %v348 = vunpack.c.l.b16 %v142
    %v349 = vunpack.c.h.b16 %v142
    %v350 = vunpack.c.l.b16 %v143
    %v351 = vunpack.c.h.b16 %v143
    %v352 = vunpack.c.l.b16 %v144
    %v353 = vunpack.c.h.b16 %v144
    %v354 = vunpack.c.l.b16 %v145
    %v355 = vunpack.c.h.b16 %v145
    %v356 = vunpack.c.l.b16 %v146
    %v357 = vunpack.c.h.b16 %v146
    %v358 = vunpack.c.l.b16 %v147
    %v359 = vunpack.c.h.b16 %v147
    %v360 = vunpack.c.l.b16 %v148
    %v361 = vunpack.c.h.b16 %v148
    %v362 = vunpack.c.l.b16 %v149
    %v363 = vunpack.c.h.b16 %v149
    %v364 = vunpack.c.l.b16 %v150
    %v365 = vunpack.c.h.b16 %v150
    %v366 = vunpack.c.l.b16 %v151
    %v367 = vunpack.c.h.b16 %v151
    %v368 = vunpack.c.l.b16 %v152
    %v369 = vunpack.c.h.b16 %v152
    %v370 = vunpack.c.l.b16 %v153
    %v371 = vunpack.c.h.b16 %v153
    %v372 = vunpack.c.l.b16 %v154
    %v373 = vunpack.c.h.b16 %v154
    %v374 = vunpack.c.l.b16 %v155
    %v375 = vunpack.c.h.b16 %v155
    %v376 = vunpack.c.l.b16 %v156
    %v377 = vunpack.c.h.b16 %v156
    %v378 = vunpack.c.l.b16 %v157
    %v379 = vunpack.c.h.b16 %v157
    %v380 = vunpack.c.l.b16 %v158
    %v381 = vunpack.c.h.b16 %v158
    %v382 = vunpack.c.l.b16 %v159
    %v383 = vunpack.c.h.b16 %v159
    %v384 = vunpack.c.l.b16 %v160
    %v385 = vunpack.c.h.b16 %v160
    %v386 = vunpack.c.l.b16 %v161
    %v387 = vunpack.c.h.b16 %v161
    %v388 = vunpack.c.l.b16 %v162
    %v389 = vunpack.c.h.b16 %v162
    %v390 = vunpack.c.l.b16 %v163
    %v391 = vunpack.c.h.b16 %v163
    %v392 = vunpack.c.l.b16 %v164
    %v393 = vunpack.c.h.b16 %v164
    %v394 = vunpack.c.l.b16 %v165
    %v395 = vunpack.c.h.b16 %v165
    %v396 = vunpack.c.l.b16 %v166
    %v397 = vunpack.c.h.b16 %v166
    %v398 = vunpack.c.l.b16 %v167
    %v399 = vunpack.c.h.b16 %v167
    %v400 = vunpack.c.l.b16 %v168
    %v401 = vunpack.c.h.b16 %v168
    %v402 = vunpack.c.l.b16 %v169
    %v403 = vunpack.c.h.b16 %v169
    %v404 = vunpack.c.l.b16 %v170
    %v405 = vunpack.c.h.b16 %v170
    %v406 = vunpack.c.l.b16 %v171
    %v407 = vunpack.c.h.b16 %v171
    %v408 = vunpack.c.l.b16 %v172
    %v409 = vunpack.c.h.b16 %v172
    %v410 = vunpack.c.l.b16 %v173
    %v411 = vunpack.c.h.b16 %v173
    %v412 = vunpack.c.l.b16 %v174
    %v413 = vunpack.c.h.b16 %v174
    %v414 = vunpack.c.l.b16 %v175
    %v415 = vunpack.c.h.b16 %v175
    %v416 = vunpack.c.l.b16 %v176
    %v417 = vunpack.c.h.b16 %v176
    %v418 = vunpack.c.l.b16 %v177
    %v419 = vunpack.c.h.b16 %v177
    %v420 = vunpack.c.l.b16 %v178
    %v421 = vunpack.c.h.b16 %v178
    %v422 = vunpack.c.l.b16 %v179
    %v423 = vunpack.c.h.b16 %v179
    %v424 = vunpack.c.l.b16 %v180
    %v425 = vunpack.c.h.b16 %v180
    %v426 = vunpack.c.l.b16 %v181
    %v427 = vunpack.c.h.b16 %v181
    %v428 = vunpack.c.l.b16 %v182
    %v429 = vunpack.c.h.b16 %v182
    %v430 = vunpack.c.l.b16 %v183
    %v431 = vunpack.c.h.b16 %v183
    %v432 = vunpack.c.l.b16 %v184
    %v433 = vunpack.c.h.b16 %v184
    %v434 = vunpack.c.l.b16 %v185
    %v435 = vunpack.c.h.b16 %v185
    %v436 = vunpack.c.l.b16 %v186
    %v437 = vunpack.c.h.b16 %v186
    %v438 = vunpack.c.l.b16 %v187
    %v439 = vunpack.c.h.b16 %v187
    %v440 = vunpack.c.l.b16 %v188
    %v441 = vunpack.c.h.b16 %v188
    %v442 = vunpack.c.l.b16 %v189
    %v443 = vunpack.c.h.b16 %v189
    %v444 = vunpack.c.l.b16 %v190
    %v445 = vunpack.c.h.b16 %v190
    %v446 = vunpack.c.l.b16 %v191
    %v447 = vunpack.c.h.b16 %v191
    %v448 = vunpack.c.l.b16 %v192
    %v449 = vunpack.c.h.b16 %v192
    %v450 = vunpack.c.l.b16 %v193
    %v451 = vunpack.c.h.b16 %v193
    %v452 = vunpack.c.l.b16 %v194
    %v453 = vunpack.c.h.b16 %v194
    %v454 = vunpack.c.l.b16 %v195
    %v455 = vunpack.c.h.b16 %v195
    %v456 = vunpack.c.l.b16 %v196
    %v457 = vunpack.c.h.b16 %v196
    %v458 = vunpack.c.l.b16 %v197
    %v459 = vunpack.c.h.b16 %v197
    %v460 = vunpack.c.l.b16 %v198
    %v461 = vunpack.c.h.b16 %v198
    %v462 = vunpack.c.l.b16 %v199
    %v463 = vunpack.c.h.b16 %v199
    %v464 = vunpack.c.l.b16 %v200
    %v465 = vunpack.c.h.b16 %v200
    %v466 = vunpack.c.l.b16 %v201
    %v467 = vunpack.c.h.b16 %v201
    %v468 = vunpack.c.l.b16 %v202
    %v469 = vunpack.c.h.b16 %v202
    %v470 = vunpack.c.l.b16 %v203
    %v471 = vunpack.c.h.b16 %v203
    %v472 = vunpack.c.l.b16 %v204
    %v473 = vunpack.c.h.b16 %v204
    %v474 = vunpack.c.l.b16 %v205
    %v475 = vunpack.c.h.b16 %v205
    %v476 = vunpack.c.l.b16 %v206
    %v477 = vunpack.c.h.b16 %v206
    %v478 = vunpack.c.l.b16 %v207
    %v479 = vunpack.c.h.b16 %v207
    %v480 = vunpack.c.l.b16 %v208
    %v481 = vunpack.c.h.b16 %v208
    %v482 = vunpack.c.l.b16 %v209
    %v483 = vunpack.c.h.b16 %v209
    %v484 = vunpack.c.l.b16 %v210
    %v485 = vunpack.c.h.b16 %v210
    %v486 = vunpack.c.l.b16 %v211
    %v487 = vunpack.c.h.b16 %v211
    %v488 = vunpack.c.l.b16 %v212
    %v489 = vunpack.c.h.b16 %v212
    %v490 = vunpack.c.l.b16 %v213
    %v491 = vunpack.c.h.b16 %v213
    %v492 = vunpack.c.l.b16 %v214
    %v493 = vunpack.c.h.b16 %v214
    %v494 = vunpack.c.l.b16 %v215
    %v495 = vunpack.c.h.b16 %v215
    %v496 = vunpack.c.l.b16 %v216
    %v497 = vunpack.c.h.b16 %v216
    %v498 = vunpack.c.l.b16 %v217
    %v499 = vunpack.c.h.b16 %v217
    %v500 = vunpack.c.l.b16 %v218
    %v501 = vunpack.c.h.b16 %v218
    %v502 = vunpack.c.l.b16 %v219
    %v503 = vunpack.c.h.b16 %v219
    %v504 = vunpack.c.l.b16 %v220
    %v505 = vunpack.c.h.b16 %v220
    %v506 = vunpack.c.l.b16 %v221
    %v507 = vunpack.c.h.b16 %v221
    %v508 = vunpack.c.l.b16 %v222
    %v509 = vunpack.c.h.b16 %v222
    %v510 = vunpack.c.l.b16 %v223
    %v511 = vunpack.c.h.b16 %v223
    %v512 = vpack.c.b16 %v322, %v320
    %v513 = vpack.c.b16 %v323, %v321
    %v514 = vpack.c.b16 %v326, %v324
    %v515 = vpack.c.b16 %v327, %v325
    %v516 = vpack.c.b16 %v330, %v328
    %v517 = vpack.c.b16 %v331, %v329
    %v518 = vpack.c.b16 %v334, %v332
    %v519 = vpack.c.b16 %v335, %v333
    %v520 = vpack.c.b16 %v338, %v336
    %v521 = vpack.c.b16 %v339, %v337
    %v522 = vpack.c.b16 %v342, %v340
    %v523 = vpack.c.b16 %v343, %v341
    %v524 = vpack.c.b16 %v346, %v344
    %v525 = vpack.c.b16 %v347, %v345
    %v526 = vpack.c.b16 %v350, %v348
    %v527 = vpack.c.b16 %v351, %v349
    %v528 = vpack.c.b16 %v354, %v352
    %v529 = vpack.c.b16 %v355, %v353
    %v530 = vpack.c.b16 %v358, %v356
    %v531 = vpack.c.b16 %v359, %v357
    %v532 = vpack.c.b16 %v362, %v360
    %v533 = vpack.c.b16 %v363, %v361
    %v534 = vpack.c.b16 %v366, %v364
    %v535 = vpack.c.b16 %v367, %v365
    %v536 = vpack.c.b16 %v370, %v368
    %v537 = vpack.c.b16 %v371, %v369
    %v538 = vpack.c.b16 %v374, %v372
    %v539 = vpack.c.b16 %v375, %v373
    %v540 = vpack.c.b16 %v378, %v376
    %v541 = vpack.c.b16 %v379, %v377
    %v542 = vpack.c.b16 %v382, %v380
    %v543 = vpack.c.b16 %v383, %v381
    %v544 = vpack.c.b16 %v386, %v384
    %v545 = vpack.c.b16 %v387, %v385
    %v546 = vpack.c.b16 %v390, %v388
    %v547 = vpack.c.b16 %v391, %v389
    %v548 = vpack.c.b16 %v394, %v392
    %v549 = vpack.c.b16 %v395, %v393
    %v550 = vpack.c.b16 %v398, %v396
    %v551 = vpack.c.b16 %v399, %v397
    %v552 = vpack.c.b16 %v402, %v400
    %v553 = vpack.c.b16 %v403, %v401
    %v554 = vpack.c.b16 %v406, %v404
    %v555 = vpack.c.b16 %v407, %v405
    %v556 = vpack.c.b16 %v410, %v408
    %v557 = vpack.c.b16 %v411, %v409
    %v558 = vpack.c.b16 %v414, %v412
    %v559 = vpack.c.b16 %v415, %v413
    %v560 = vpack.c.b16 %v418, %v416
    %v561 = vpack.c.b16 %v419, %v417
    %v562 = vpack.c.b16 %v422, %v420
    %v563 = vpack.c.b16 %v423, %v421
    %v564 = vpack.c.b16 %v426, %v424
    %v565 = vpack.c.b16 %v427, %v425
    %v566 = vpack.c.b16 %v430, %v428
    %v567 = vpack.c.b16 %v431, %v429
    %v568 = vpack.c.b16 %v434, %v432
    %v569 = vpack.c.b16 %v435, %v433
    %v570 = vpack.c.b16 %v438, %v436
    %v571 = vpack.c.b16 %v439, %v437
    %v572 = vpack.c.b16 %v442, %v440
    %v573 = vpack.c.b16 %v443, %v441
    %v574 = vpack.c.b16 %v446, %v444
    %v575 = vpack.c.b16 %v447, %v445
    %v576 = vpack.c.b16 %v450, %v448
    %v577 = vpack.c.b16 %v451, %v449
    %v578 = vpack.c.b16 %v454, %v452
    %v579 = vpack.c.b16 %v455, %v453
    %v580 = vpack.c.b16 %v458, %v456
    %v581 = vpack.c.b16 %v459, %v457
    %v582 = vpack.c.b16 %v462, %v460
    %v583 = vpack.c.b16 %v463, %v461
    %v584 = vpack.c.b16 %v466, %v464
    %v585 = vpack.c.b16 %v467, %v465
    %v586 = vpack.c.b16 %v470, %v468
    %v587 = vpack.c.b16 %v471, %v469
    %v588 = vpack.c.b16 %v474, %v472
    %v589 = vpack.c.b16 %v475, %v473
    %v590 = vpack.c.b16 %v478, %v476
    %v591 = vpack.c.b16 %v479, %v477
    %v592 = vpack.c.b16 %v482, %v480
    %v593 = vpack.c.b16 %v483, %v481
    %v594 = vpack.c.b16 %v486, %v484
    %v595 = vpack.c.b16 %v487, %v485
    %v596 = vpack.c.b16 %v490, %v488
    %v597 = vpack.c.b16 %v491, %v489
    %v598 = vpack.c.b16 %v494, %v492
    %v599 = vpack.c.b16 %v495, %v493
    %v600 = vpack.c.b16 %v498, %v496
    %v601 = vpack.c.b16 %v499, %v497
    %v602 = vpack.c.b16 %v502, %v500
    %v603 = vpack.c.b16 %v503, %v501
    %v604 = vpack.c.b16 %v506, %v504
    %v605 = vpack.c.b16 %v507, %v505
    %v606 = vpack.c.b16 %v510, %v508
    %v607 = vpack.c.b16 %v511, %v509
    %704 = vmatprep.subr.bf16.mxu0 %v513
    %705 = vmatpush1.bf16.msra.mxu0 %v512
    %706 = vmatprep.subr.bf16.mxu0 %v515
    %707 = vmatpush1.bf16.msra.mxu0 %v514
    %708 = vmatprep.subr.bf16.mxu0 %v517
    %709 = vmatpush1.bf16.msra.mxu0 %v516
    %710 = vmatprep.subr.bf16.mxu0 %v519
    %711 = vmatpush1.bf16.msra.mxu0 %v518
    %712 = vmatprep.subr.bf16.mxu0 %v521
    %713 = vmatpush1.bf16.msra.mxu0 %v520
    %714 = vmatprep.subr.bf16.mxu0 %v523
    %715 = vmatpush1.bf16.msra.mxu0 %v522
    %716 = vmatprep.subr.bf16.mxu0 %v525
    %717 = vmatpush1.bf16.msra.mxu0 %v524
    %718 = vmatprep.subr.bf16.mxu0 %v527
    %719 = vmatpush1.bf16.msra.mxu0 %v526
    %720 = vmatprep.subr.bf16.mxu0 %v529
    %721 = vmatpush1.bf16.msra.mxu0 %v528
    %722 = vmatprep.subr.bf16.mxu0 %v531
    %723 = vmatpush1.bf16.msra.mxu0 %v530
    %724 = vmatprep.subr.bf16.mxu0 %v533
    %725 = vmatpush1.bf16.msra.mxu0 %v532
    %726 = vmatprep.subr.bf16.mxu0 %v535
    %727 = vmatpush1.bf16.msra.mxu0 %v534
    %728 = vmatprep.subr.bf16.mxu0 %v537
    %729 = vmatpush1.bf16.msra.mxu0 %v536
    %730 = vmatprep.subr.bf16.mxu0 %v539
    %731 = vmatpush1.bf16.msra.mxu0 %v538
    %732 = vmatprep.subr.bf16.mxu0 %v541
    %733 = vmatpush1.bf16.msra.mxu0 %v540
    %734 = vmatprep.subr.bf16.mxu0 %v543
    %735 = vmatpush1.bf16.msra.mxu0 %v542
    %736 = vmatprep.mubr.bf16.mxu0 %v123
    %737 = vmatmul.mubr.bf16.gmra.mrb[0].mxu0 %v122
    %v738 = vpop.f32.mrb[0].mxu0
    %v739 = vadd.f32 0.0, %v738
    %v740 = vpop.f32.mrb[0].mxu0
    %v741 = vadd.f32 0.0, %v740
    %v742 = vpop.f32.mrb[0].mxu0
    %v743 = vadd.f32 0.0, %v742
    %v744 = vpop.f32.mrb[0].mxu0
    %v745 = vadd.f32 0.0, %v744
    %746 = vdwg.mxu0
    %747 = vmatprep.subr.bf16.mxu0 %v545
    %748 = vmatpush1.bf16.msra.mxu0 %v544
    %749 = vmatprep.subr.bf16.mxu0 %v547
    %750 = vmatpush1.bf16.msra.mxu0 %v546
    %751 = vmatprep.subr.bf16.mxu0 %v549
    %752 = vmatpush1.bf16.msra.mxu0 %v548
    %753 = vmatprep.subr.bf16.mxu0 %v551
    %754 = vmatpush1.bf16.msra.mxu0 %v550
    %755 = vmatprep.subr.bf16.mxu0 %v553
    %756 = vmatpush1.bf16.msra.mxu0 %v552
    %757 = vmatprep.subr.bf16.mxu0 %v555
    %758 = vmatpush1.bf16.msra.mxu0 %v554
    %759 = vmatprep.subr.bf16.mxu0 %v557
    %760 = vmatpush1.bf16.msra.mxu0 %v556
    %761 = vmatprep.subr.bf16.mxu0 %v559
    %762 = vmatpush1.bf16.msra.mxu0 %v558
    %763 = vmatprep.subr.bf16.mxu0 %v561
    %764 = vmatpush1.bf16.msra.mxu0 %v560
    %765 = vmatprep.subr.bf16.mxu0 %v563
    %766 = vmatpush1.bf16.msra.mxu0 %v562
    %767 = vmatprep.subr.bf16.mxu0 %v565
    %768 = vmatpush1.bf16.msra.mxu0 %v564
    %769 = vmatprep.subr.bf16.mxu0 %v567
    %770 = vmatpush1.bf16.msra.mxu0 %v566
    %771 = vmatprep.subr.bf16.mxu0 %v569
    %772 = vmatpush1.bf16.msra.mxu0 %v568
    %773 = vmatprep.subr.bf16.mxu0 %v571
    %774 = vmatpush1.bf16.msra.mxu0 %v570
    %775 = vmatprep.subr.bf16.mxu0 %v573
    %776 = vmatpush1.bf16.msra.mxu0 %v572
    %777 = vmatprep.subr.bf16.mxu0 %v575
    %778 = vmatpush1.bf16.msra.mxu0 %v574
    %779 = vmatprep.mubr.bf16.mxu0 %v125
    %780 = vmatmul.mubr.bf16.gmra.mrb[0].mxu0 %v124
    %v781 = vpop.f32.mrb[0].mxu0
    %v782 = vadd.f32 %v739, %v781
    %v783 = vpop.f32.mrb[0].mxu0
    %v784 = vadd.f32 %v741, %v783
    %v785 = vpop.f32.mrb[0].mxu0
    %v786 = vadd.f32 %v743, %v785
    %v787 = vpop.f32.mrb[0].mxu0
    %v788 = vadd.f32 %v745, %v787
    %789 = vdwg.mxu0
    %790 = vmatprep.subr.bf16.mxu0 %v577
    %791 = vmatpush1.bf16.msra.mxu0 %v576
    %792 = vmatprep.subr.bf16.mxu0 %v579
    %793 = vmatpush1.bf16.msra.mxu0 %v578
    %794 = vmatprep.subr.bf16.mxu0 %v581
    %795 = vmatpush1.bf16.msra.mxu0 %v580
    %796 = vmatprep.subr.bf16.mxu0 %v583
    %797 = vmatpush1.bf16.msra.mxu0 %v582
    %798 = vmatprep.subr.bf16.mxu0 %v585
    %799 = vmatpush1.bf16.msra.mxu0 %v584
    %800 = vmatprep.subr.bf16.mxu0 %v587
    %801 = vmatpush1.bf16.msra.mxu0 %v586
    %802 = vmatprep.subr.bf16.mxu0 %v589
    %803 = vmatpush1.bf16.msra.mxu0 %v588
    %804 = vmatprep.subr.bf16.mxu0 %v591
    %805 = vmatpush1.bf16.msra.mxu0 %v590
    %806 = vmatprep.subr.bf16.mxu0 %v593
    %807 = vmatpush1.bf16.msra.mxu0 %v592
    %808 = vmatprep.subr.bf16.mxu0 %v595
    %809 = vmatpush1.bf16.msra.mxu0 %v594
    %810 = vmatprep.subr.bf16.mxu0 %v597
    %811 = vmatpush1.bf16.msra.mxu0 %v596
    %812 = vmatprep.subr.bf16.mxu0 %v599
    %813 = vmatpush1.bf16.msra.mxu0 %v598
    %814 = vmatprep.subr.bf16.mxu0 %v601
    %815 = vmatpush1.bf16.msra.mxu0 %v600
    %816 = vmatprep.subr.bf16.mxu0 %v603
    %817 = vmatpush1.bf16.msra.mxu0 %v602
    %818 = vmatprep.subr.bf16.mxu0 %v605
    %819 = vmatpush1.bf16.msra.mxu0 %v604
    %820 = vmatprep.subr.bf16.mxu0 %v607
    %821 = vmatpush1.bf16.msra.mxu0 %v606
    %822 = vmatprep.mubr.bf16.mxu0 %v127
    %823 = vmatmul.mubr.bf16.gmra.mrb[0].mxu0 %v126
    %v824 = vpop.f32.mrb[0].mxu0
    %v825 = vadd.f32 %v782, %v824
    %v826 = vpop.f32.mrb[0].mxu0
    %v827 = vadd.f32 %v784, %v826
    %v828 = vpop.f32.mrb[0].mxu0
    %v829 = vadd.f32 %v786, %v828
    %v830 = vpop.f32.mrb[0].mxu0
    %v831 = vadd.f32 %v788, %v830
    %832 = vdwg.mxu0
    %v833 = vadd.f32 %v825, %v829
    %v834 = vrot.slane %v833, 4
    %v835 = vadd.f32 %v833, %v834
    %v836 = vrot.slane %v835, 2
    %v837 = vadd.f32 %v835, %v836
    %v838 = vrot.slane %v837, 1
    %v839 = vadd.f32 %v837, %v838
    %v840 = vadd.f32 %v827, %v831
    %v841 = vrot.slane %v840, 4
    %v842 = vadd.f32 %v840, %v841
    %v843 = vrot.slane %v842, 2
    %v844 = vadd.f32 %v842, %v843
    %v845 = vrot.slane %v844, 1
    %v846 = vadd.f32 %v844, %v845
    %v847 = vmul.f32 %v825, %v825
    %v848 = vmul.f32 %v827, %v827
    %v849 = vmul.f32 %v829, %v829
    %v850 = vmul.f32 %v831, %v831
    %v851 = vadd.f32 %v847, %v849
    %v852 = vrot.slane %v851, 4
    %v853 = vadd.f32 %v851, %v852
    %v854 = vrot.slane %v853, 2
    %v855 = vadd.f32 %v853, %v854
    %v856 = vrot.slane %v855, 1
    %v857 = vadd.f32 %v855, %v856
    %v858 = vadd.f32 %v848, %v850
    %v859 = vrot.slane %v858, 4
    %v860 = vadd.f32 %v858, %v859
    %v861 = vrot.slane %v860, 2
    %v862 = vadd.f32 %v860, %v861
    %v863 = vrot.slane %v862, 1
    %v864 = vadd.f32 %v862, %v863
    %vm865 = vcmask 1040384
    %v866 = vsel %vm865, %v839, %v857
    %v867 = vsel %vm865, %v846, %v864
    %v868 = vld [vmem:[%s7] sm:$0xff]
    %v869 = vld [vmem:[%s7 + $0x8] sm:$0xff]
    %v870 = vld [vmem:[%s7 + $0x10] sm:$0xff]
    %v871 = vld [vmem:[%s7 + $0x18] sm:$0xff]
    %v872 = vld [vmem:[%s7 + $0x20] sm:$0xff]
    %v873 = vld [vmem:[%s7 + $0x28] sm:$0xff]
    %v874 = vld [vmem:[%s7 + $0x30] sm:$0xff]
    %v875 = vld [vmem:[%s7 + $0x38] sm:$0xff]
    %v876 = vld [vmem:[%s7 + $0x40] sm:$0xff]
    %v877 = vld [vmem:[%s7 + $0x48] sm:$0xff]
    %v878 = vld [vmem:[%s7 + $0x50] sm:$0xff]
    %v879 = vld [vmem:[%s7 + $0x58] sm:$0xff]
    %v880 = vld [vmem:[%s7 + $0x60] sm:$0xff]
    %v881 = vld [vmem:[%s7 + $0x68] sm:$0xff]
    %v882 = vld [vmem:[%s7 + $0x70] sm:$0xff]
    %v883 = vld [vmem:[%s7 + $0x78] sm:$0xff]
    %v884 = vld [vmem:[%s7 + $0x80] sm:$0xff]
    %v885 = vld [vmem:[%s7 + $0x88] sm:$0xff]
    %v886 = vld [vmem:[%s7 + $0x90] sm:$0xff]
    %v887 = vld [vmem:[%s7 + $0x98] sm:$0xff]
    %v888 = vld [vmem:[%s7 + $0xa0] sm:$0xff]
    %v889 = vld [vmem:[%s7 + $0xa8] sm:$0xff]
    %v890 = vld [vmem:[%s7 + $0xb0] sm:$0xff]
    %v891 = vld [vmem:[%s7 + $0xb8] sm:$0xff]
    %v892 = vld [vmem:[%s7 + $0xc0] sm:$0xff]
    %v893 = vld [vmem:[%s7 + $0xc8] sm:$0xff]
    %v894 = vld [vmem:[%s7 + $0xd0] sm:$0xff]
    %v895 = vld [vmem:[%s7 + $0xd8] sm:$0xff]
    %v896 = vld [vmem:[%s7 + $0xe0] sm:$0xff]
    %v897 = vld [vmem:[%s7 + $0xe8] sm:$0xff]
    %v898 = vld [vmem:[%s7 + $0xf0] sm:$0xff]
    %v899 = vld [vmem:[%s7 + $0xf8] sm:$0xff]
    %900 = vmatprep.subr.mxu0 0.0
    %901 = vmatpush1.msra.mxu0 %v868
    %902 = vmatprep.subr.mxu0 0.0
    %903 = vmatpush1.msra.mxu0 %v869
    %904 = vmatprep.subr.mxu0 0.0
    %905 = vmatpush1.msra.mxu0 %v870
    %906 = vmatprep.subr.mxu0 0.0
    %907 = vmatpush1.msra.mxu0 %v871
    %908 = vmatprep.subr.mxu0 0.0
    %909 = vmatpush1.msra.mxu0 %v872
    %910 = vmatprep.subr.mxu0 0.0
    %911 = vmatpush1.msra.mxu0 %v873
    %912 = vmatprep.subr.mxu0 0.0
    %913 = vmatpush1.msra.mxu0 %v874
    %914 = vmatprep.subr.mxu0 0.0
    %915 = vmatpush1.msra.mxu0 %v875
    %916 = vmatprep.subr.mxu0 0.0
    %917 = vmatpush1.msra.mxu0 %v876
    %918 = vmatprep.subr.mxu0 0.0
    %919 = vmatpush1.msra.mxu0 %v877
    %920 = vmatprep.subr.mxu0 0.0
    %921 = vmatpush1.msra.mxu0 %v878
    %922 = vmatprep.subr.mxu0 0.0
    %923 = vmatpush1.msra.mxu0 %v879
    %924 = vmatprep.subr.mxu0 0.0
    %925 = vmatpush1.msra.mxu0 %v880
    %926 = vmatprep.subr.mxu0 0.0
    %927 = vmatpush1.msra.mxu0 %v881
    %928 = vmatprep.subr.mxu0 0.0
    %929 = vmatpush1.msra.mxu0 %v882
    %930 = vmatprep.subr.mxu0 0.0
    %931 = vmatpush1.msra.mxu0 %v883
    %932 = vmatprep.subr.mxu0 0.0
    %933 = vmatpush1.msra.mxu0 %v884
    %934 = vmatprep.subr.mxu0 0.0
    %935 = vmatpush1.msra.mxu0 %v885
    %936 = vmatprep.subr.mxu0 0.0
    %937 = vmatpush1.msra.mxu0 %v886
    %938 = vmatprep.subr.mxu0 0.0
    %939 = vmatpush1.msra.mxu0 %v887
    %940 = vmatprep.subr.mxu0 0.0
    %941 = vmatpush1.msra.mxu0 %v888
    %942 = vmatprep.subr.mxu0 0.0
    %943 = vmatpush1.msra.mxu0 %v889
    %944 = vmatprep.subr.mxu0 0.0
    %945 = vmatpush1.msra.mxu0 %v890
    %946 = vmatprep.subr.mxu0 0.0
    %947 = vmatpush1.msra.mxu0 %v891
    %948 = vmatprep.subr.mxu0 0.0
    %949 = vmatpush1.msra.mxu0 %v892
    %950 = vmatprep.subr.mxu0 0.0
    %951 = vmatpush1.msra.mxu0 %v893
    %952 = vmatprep.subr.mxu0 0.0
    %953 = vmatpush1.msra.mxu0 %v894
    %954 = vmatprep.subr.mxu0 0.0
    %955 = vmatpush1.msra.mxu0 %v895
    %956 = vmatprep.subr.mxu0 0.0
    %957 = vmatpush1.msra.mxu0 %v896
    %958 = vmatprep.subr.mxu0 0.0
    %959 = vmatpush1.msra.mxu0 %v897
    %960 = vmatprep.subr.mxu0 0.0
    %961 = vmatpush1.msra.mxu0 %v898
    %962 = vmatprep.subr.mxu0 0.0
    %963 = vmatpush1.msra.mxu0 %v899
    %964 = vmatprep.mubr.f32.mxu0 %v867
    %965 = vmatmul.mubr.f32.gmra.mrb[0].mxu0 %v866
    %v966 = vpop.f32.mrb[0].mxu0
    %v967 = vadd.f32 0.0, %v966
    %v968 = vpop.f32.mrb[0].mxu0
    %969 = vdwg.mxu0
    %v970 = vmul.f32 %v967, 0.0009765625
    %v971 = vmul.f32 %v970, %v970
    %v973 = vrot.slane %v971, 7
    %v975 = vsub.f32 %v970, %v973
    %v976 = vld [vmem:[%s3] sm:$0x1]
    %v977 = vadd.f32 %v975, 1e-05
    %v978 = vrsqrt.pop %v977
    %v981 = vunpack.c.l.s4 1966171168
    %v982 = vunpack.c.0.s8 %v981
    %v983 = vlaneseq
    %v984 = vshrl.u32 %v983, 7
    %v985 = vsub.s32 %v982, %v984
    %v986 = vrot.slane %v978, %v985
    %v987 = vcombine.high %v986, %v986
    %v989 = vunpack.c.l.s4 1966171168
    %v990 = vunpack.c.0.s8 %v989
    %v991 = vlaneseq
    %v992 = vshrl.u32 %v991, 7
    %v993 = vsub.s32 %v990, %v992
    %v994 = vrot.slane %v987, %v993
    %v996 = vmul.f32 %v976, %v994
    %v997 = vld [vmem:[%s4] sm:$0x1]
    %v998 = vmul.f32 %v970, %v996
    %v999 = vsub.f32 %v997, %v998
    %v1001 = vlaneseq
    %v1002 = vshrl.u32 %v1001, 7
    %v1003 = vsub.s32 0, %v1002
    %v1004 = vrot.slane %v999, %v1003
    %v1006 = vsel %vm865, %v996, %v1004
    %v1007 = vld [vmem:[%s8] sm:$0xff]
    %v1009 = vcombine.high %v1007, %v1007
    %vm1010 = vcmask 31744
    %v1012 = vsel %vm1010, %v1006, 0
    %vm1014 = vcmask 1043456
    %v1015 = vsel %vm1014, %v1007, 0
    %v1017 = vsel %vm1014, %v1009, 0
    %1019 = vmatprep.subr.mxu0 %v1017
    %1020 = vmatpush1.msra.mxu0 %v1015
    %1021 = vmatprep.subr.mxu0 0.0
    %1022 = vmatpush1.msra.mxu0 0.0
    %1023 = vmatprep.subr.mxu0 0.0
    %1024 = vmatpush1.msra.mxu0 0.0
    %1025 = vmatprep.subr.mxu0 0.0
    %1026 = vmatpush1.msra.mxu0 0.0
    %1027 = vmatprep.subr.mxu0 0.0
    %1028 = vmatpush1.msra.mxu0 0.0
    %1029 = vmatprep.subr.mxu0 0.0
    %1030 = vmatpush1.msra.mxu0 0.0
    %1031 = vmatprep.subr.mxu0 0.0
    %1032 = vmatpush1.msra.mxu0 0.0
    %1033 = vmatprep.subr.mxu0 0.0
    %1034 = vmatpush1.msra.mxu0 0.0
    %1035 = vmatprep.subr.mxu0 0.0
    %1036 = vmatpush1.msra.mxu0 0.0
    %1037 = vmatprep.subr.mxu0 0.0
    %1038 = vmatpush1.msra.mxu0 0.0
    %1039 = vmatprep.subr.mxu0 0.0
    %1040 = vmatpush1.msra.mxu0 0.0
    %1041 = vmatprep.subr.mxu0 0.0
    %1042 = vmatpush1.msra.mxu0 0.0
    %1043 = vmatprep.subr.mxu0 0.0
    %1044 = vmatpush1.msra.mxu0 0.0
    %1045 = vmatprep.subr.mxu0 0.0
    %1046 = vmatpush1.msra.mxu0 0.0
    %1047 = vmatprep.subr.mxu0 0.0
    %1048 = vmatpush1.msra.mxu0 0.0
    %1049 = vmatprep.subr.mxu0 0.0
    %1050 = vmatpush1.msra.mxu0 0.0
    %1051 = vmatprep.subr.mxu0 0.0
    %1052 = vmatpush1.msra.mxu0 0.0
    %1053 = vmatprep.subr.mxu0 0.0
    %1054 = vmatpush1.msra.mxu0 0.0
    %1055 = vmatprep.subr.mxu0 0.0
    %1056 = vmatpush1.msra.mxu0 0.0
    %1057 = vmatprep.subr.mxu0 0.0
    %1058 = vmatpush1.msra.mxu0 0.0
    %1059 = vmatprep.subr.mxu0 0.0
    %1060 = vmatpush1.msra.mxu0 0.0
    %1061 = vmatprep.subr.mxu0 0.0
    %1062 = vmatpush1.msra.mxu0 0.0
    %1063 = vmatprep.subr.mxu0 0.0
    %1064 = vmatpush1.msra.mxu0 0.0
    %1065 = vmatprep.subr.mxu0 0.0
    %1066 = vmatpush1.msra.mxu0 0.0
    %1067 = vmatprep.subr.mxu0 0.0
    %1068 = vmatpush1.msra.mxu0 0.0
    %1069 = vmatprep.subr.mxu0 0.0
    %1070 = vmatpush1.msra.mxu0 0.0
    %1071 = vmatprep.subr.mxu0 0.0
    %1072 = vmatpush1.msra.mxu0 0.0
    %1073 = vmatprep.subr.mxu0 0.0
    %1074 = vmatpush1.msra.mxu0 0.0
    %1075 = vmatprep.subr.mxu0 0.0
    %1076 = vmatpush1.msra.mxu0 0.0
    %1077 = vmatprep.subr.mxu0 0.0
    %1078 = vmatpush1.msra.mxu0 0.0
    %1079 = vmatprep.subr.mxu0 0.0
    %1080 = vmatpush1.msra.mxu0 0.0
    %1081 = vmatprep.subr.mxu0 0.0
    %1082 = vmatpush1.msra.mxu0 0.0
    %1083 = vmatprep.mubr.f32.mxu0 0.0
    %1084 = vmatmul.mubr.f32.gmra.mrb[0].mxu0 %v1012
    %v1085 = vpop.f32.mrb[0].mxu0
    %v1086 = vadd.f32 0.0, %v1085
    %v1087 = vpop.f32.mrb[0].mxu0
    %v1088 = vadd.f32 0.0, %v1087
    %1089 = vdwg.mxu0
    %v1090 = vlaneseq
    %v1091 = vshrl.u32 %v1090, 7
    %v1092 = vsub.s32 0, %v1091
    %v1093 = vrot.slane %v1086, %v1092
    %v1094 = vlaneseq
    %v1095 = vshrl.u32 %v1094, 7
    %v1096 = vsub.s32 0, %v1095
    %v1097 = vrot.slane %v1088, %v1096
    %v1098 = vmul.f32 %v825, %v1093
    %v1099 = vmul.f32 %v827, %v1097
    %v1100 = vmul.f32 %v829, %v1093
    %v1101 = vmul.f32 %v831, %v1097
    %v1102 = vlaneseq
    %v1103 = vshrl.u32 %v1102, 7
    %v1104 = vsub.s32 1, %v1103
    %v1105 = vrot.slane %v1086, %v1104
    %v1106 = vlaneseq
    %v1107 = vshrl.u32 %v1106, 7
    %v1108 = vsub.s32 1, %v1107
    %v1109 = vrot.slane %v1088, %v1108
    %v1110 = vadd.f32 %v1098, %v1105
    %v1111 = vadd.f32 %v1099, %v1109
    %v1112 = vadd.f32 %v1100, %v1105
    %v1113 = vadd.f32 %v1101, %v1109
    %v1114 = vmax.f32 %v1110, 0.0
    %v1115 = vmax.f32 %v1111, 0.0
    %v1116 = vmax.f32 %v1112, 0.0
    %v1117 = vmax.f32 %v1113, 0.0
    %v1118 = vrot.slane %v1114, 7
    %v1119 = vrot.slane %v1115, 7
    %v1120 = vrot.slane %v1116, 7
    %v1121 = vrot.slane %v1117, 7
    %v1122 = vsel %vm100, %v1118, %v1120
    %v1123 = vsel %vm100, %v1119, %v1121
    %v1124 = vsel %vm100, %v1120, %v1118
    %v1125 = vsel %vm100, %v1121, %v1119
    %v1126 = vsel %vm92, %v1124, 0.0
    %v1127 = vsel %vm92, %v1125, 0.0
    %v1128 = vsel %vm93, %v1122, 0.0
    %v1129 = vsel %vm93, %v1123, 0.0
    %v1130 = vrot.slane %v1114, 1
    %v1131 = vrot.slane %v1115, 1
    %v1132 = vrot.slane %v1116, 1
    %v1133 = vrot.slane %v1117, 1
    %v1134 = vsel %vm113, %v1130, %v1132
    %v1135 = vsel %vm113, %v1131, %v1133
    %v1136 = vsel %vm113, %v1132, %v1130
    %v1137 = vsel %vm113, %v1133, %v1131
    %v1138 = vsel %vm94, %v1134, 0.0
    %v1139 = vsel %vm94, %v1135, 0.0
    %v1140 = vsel %vm95, %v1136, 0.0
    %v1141 = vsel %vm95, %v1137, 0.0
    %v1142 = vpack.c.bf16 %v1128, %v1126
    %v1143 = vpack.c.bf16 %v1129, %v1127
    %v1144 = vpack.c.bf16 %v1116, %v1114
    %v1145 = vpack.c.bf16 %v1117, %v1115
    %v1146 = vpack.c.bf16 %v1140, %v1138
    %v1147 = vpack.c.bf16 %v1141, %v1139
    %v1148 = vld [vmem:[#allocation5] sm:$0xff]
    %v1149 = vld [vmem:[#allocation5 + $0x8] sm:$0xff]
    %v1150 = vld [vmem:[#allocation5 + $0x10] sm:$0xff]
    %v1151 = vld [vmem:[#allocation5 + $0x18] sm:$0xff]
    %v1152 = vld [vmem:[#allocation5 + $0x20] sm:$0xff]
    %v1153 = vld [vmem:[#allocation5 + $0x28] sm:$0xff]
    %v1154 = vld [vmem:[#allocation5 + $0x30] sm:$0xff]
    %v1155 = vld [vmem:[#allocation5 + $0x38] sm:$0xff]
    %v1156 = vld [vmem:[#allocation5 + $0x40] sm:$0xff]
    %v1157 = vld [vmem:[#allocation5 + $0x48] sm:$0xff]
    %v1158 = vld [vmem:[#allocation5 + $0x50] sm:$0xff]
    %v1159 = vld [vmem:[#allocation5 + $0x58] sm:$0xff]
    %v1160 = vld [vmem:[#allocation5 + $0x60] sm:$0xff]
    %v1161 = vld [vmem:[#allocation5 + $0x68] sm:$0xff]
    %v1162 = vld [vmem:[#allocation5 + $0x70] sm:$0xff]
    %v1163 = vld [vmem:[#allocation5 + $0x78] sm:$0xff]
    %v1164 = vld [vmem:[#allocation5 + $0x80] sm:$0xff]
    %v1165 = vld [vmem:[#allocation5 + $0x88] sm:$0xff]
    %v1166 = vld [vmem:[#allocation5 + $0x90] sm:$0xff]
    %v1167 = vld [vmem:[#allocation5 + $0x98] sm:$0xff]
    %v1168 = vld [vmem:[#allocation5 + $0xa0] sm:$0xff]
    %v1169 = vld [vmem:[#allocation5 + $0xa8] sm:$0xff]
    %v1170 = vld [vmem:[#allocation5 + $0xb0] sm:$0xff]
    %v1171 = vld [vmem:[#allocation5 + $0xb8] sm:$0xff]
    %v1172 = vld [vmem:[#allocation5 + $0xc0] sm:$0xff]
    %v1173 = vld [vmem:[#allocation5 + $0xc8] sm:$0xff]
    %v1174 = vld [vmem:[#allocation5 + $0xd0] sm:$0xff]
    %v1175 = vld [vmem:[#allocation5 + $0xd8] sm:$0xff]
    %v1176 = vld [vmem:[#allocation5 + $0xe0] sm:$0xff]
    %v1177 = vld [vmem:[#allocation5 + $0xe8] sm:$0xff]
    %v1178 = vld [vmem:[#allocation5 + $0xf0] sm:$0xff]
    %v1179 = vld [vmem:[#allocation5 + $0xf8] sm:$0xff]
    %v1180 = vld [vmem:[#allocation5 + $0x100] sm:$0xff]
    %v1181 = vld [vmem:[#allocation5 + $0x108] sm:$0xff]
    %v1182 = vld [vmem:[#allocation5 + $0x110] sm:$0xff]
    %v1183 = vld [vmem:[#allocation5 + $0x118] sm:$0xff]
    %v1184 = vld [vmem:[#allocation5 + $0x120] sm:$0xff]
    %v1185 = vld [vmem:[#allocation5 + $0x128] sm:$0xff]
    %v1186 = vld [vmem:[#allocation5 + $0x130] sm:$0xff]
    %v1187 = vld [vmem:[#allocation5 + $0x138] sm:$0xff]
    %v1188 = vld [vmem:[#allocation5 + $0x140] sm:$0xff]
    %v1189 = vld [vmem:[#allocation5 + $0x148] sm:$0xff]
    %v1190 = vld [vmem:[#allocation5 + $0x150] sm:$0xff]
    %v1191 = vld [vmem:[#allocation5 + $0x158] sm:$0xff]
    %v1192 = vld [vmem:[#allocation5 + $0x160] sm:$0xff]
    %v1193 = vld [vmem:[#allocation5 + $0x168] sm:$0xff]
    %v1194 = vld [vmem:[#allocation5 + $0x170] sm:$0xff]
    %v1195 = vld [vmem:[#allocation5 + $0x178] sm:$0xff]
    %v1196 = vld [vmem:[#allocation5 + $0x180] sm:$0xff]
    %v1197 = vld [vmem:[#allocation5 + $0x188] sm:$0xff]
    %v1198 = vld [vmem:[#allocation5 + $0x190] sm:$0xff]
    %v1199 = vld [vmem:[#allocation5 + $0x198] sm:$0xff]
    %v1200 = vld [vmem:[#allocation5 + $0x1a0] sm:$0xff]
    %v1201 = vld [vmem:[#allocation5 + $0x1a8] sm:$0xff]
    %v1202 = vld [vmem:[#allocation5 + $0x1b0] sm:$0xff]
    %v1203 = vld [vmem:[#allocation5 + $0x1b8] sm:$0xff]
    %v1204 = vld [vmem:[#allocation5 + $0x1c0] sm:$0xff]
    %v1205 = vld [vmem:[#allocation5 + $0x1c8] sm:$0xff]
    %v1206 = vld [vmem:[#allocation5 + $0x1d0] sm:$0xff]
    %v1207 = vld [vmem:[#allocation5 + $0x1d8] sm:$0xff]
    %v1208 = vld [vmem:[#allocation5 + $0x1e0] sm:$0xff]
    %v1209 = vld [vmem:[#allocation5 + $0x1e8] sm:$0xff]
    %v1210 = vld [vmem:[#allocation5 + $0x1f0] sm:$0xff]
    %v1211 = vld [vmem:[#allocation5 + $0x1f8] sm:$0xff]
    %v1212 = vld [vmem:[#allocation5 + $0x200] sm:$0xff]
    %v1213 = vld [vmem:[#allocation5 + $0x208] sm:$0xff]
    %v1214 = vld [vmem:[#allocation5 + $0x210] sm:$0xff]
    %v1215 = vld [vmem:[#allocation5 + $0x218] sm:$0xff]
    %v1216 = vld [vmem:[#allocation5 + $0x220] sm:$0xff]
    %v1217 = vld [vmem:[#allocation5 + $0x228] sm:$0xff]
    %v1218 = vld [vmem:[#allocation5 + $0x230] sm:$0xff]
    %v1219 = vld [vmem:[#allocation5 + $0x238] sm:$0xff]
    %v1220 = vld [vmem:[#allocation5 + $0x240] sm:$0xff]
    %v1221 = vld [vmem:[#allocation5 + $0x248] sm:$0xff]
    %v1222 = vld [vmem:[#allocation5 + $0x250] sm:$0xff]
    %v1223 = vld [vmem:[#allocation5 + $0x258] sm:$0xff]
    %v1224 = vld [vmem:[#allocation5 + $0x260] sm:$0xff]
    %v1225 = vld [vmem:[#allocation5 + $0x268] sm:$0xff]
    %v1226 = vld [vmem:[#allocation5 + $0x270] sm:$0xff]
    %v1227 = vld [vmem:[#allocation5 + $0x278] sm:$0xff]
    %v1228 = vld [vmem:[#allocation5 + $0x280] sm:$0xff]
    %v1229 = vld [vmem:[#allocation5 + $0x288] sm:$0xff]
    %v1230 = vld [vmem:[#allocation5 + $0x290] sm:$0xff]
    %v1231 = vld [vmem:[#allocation5 + $0x298] sm:$0xff]
    %v1232 = vld [vmem:[#allocation5 + $0x2a0] sm:$0xff]
    %v1233 = vld [vmem:[#allocation5 + $0x2a8] sm:$0xff]
    %v1234 = vld [vmem:[#allocation5 + $0x2b0] sm:$0xff]
    %v1235 = vld [vmem:[#allocation5 + $0x2b8] sm:$0xff]
    %v1236 = vld [vmem:[#allocation5 + $0x2c0] sm:$0xff]
    %v1237 = vld [vmem:[#allocation5 + $0x2c8] sm:$0xff]
    %v1238 = vld [vmem:[#allocation5 + $0x2d0] sm:$0xff]
    %v1239 = vld [vmem:[#allocation5 + $0x2d8] sm:$0xff]
    %v1240 = vld [vmem:[#allocation5 + $0x2e0] sm:$0xff]
    %v1241 = vld [vmem:[#allocation5 + $0x2e8] sm:$0xff]
    %v1242 = vld [vmem:[#allocation5 + $0x2f0] sm:$0xff]
    %v1243 = vld [vmem:[#allocation5 + $0x2f8] sm:$0xff]
    %v1340 = vunpack.c.l.b16 %v1148
    %v1341 = vunpack.c.h.b16 %v1148
    %v1342 = vunpack.c.l.b16 %v1149
    %v1343 = vunpack.c.h.b16 %v1149
    %v1344 = vunpack.c.l.b16 %v1150
    %v1345 = vunpack.c.h.b16 %v1150
    %v1346 = vunpack.c.l.b16 %v1151
    %v1347 = vunpack.c.h.b16 %v1151
    %v1348 = vunpack.c.l.b16 %v1152
    %v1349 = vunpack.c.h.b16 %v1152
    %v1350 = vunpack.c.l.b16 %v1153
    %v1351 = vunpack.c.h.b16 %v1153
    %v1352 = vunpack.c.l.b16 %v1154
    %v1353 = vunpack.c.h.b16 %v1154
    %v1354 = vunpack.c.l.b16 %v1155
    %v1355 = vunpack.c.h.b16 %v1155
    %v1356 = vunpack.c.l.b16 %v1156
    %v1357 = vunpack.c.h.b16 %v1156
    %v1358 = vunpack.c.l.b16 %v1157
    %v1359 = vunpack.c.h.b16 %v1157
    %v1360 = vunpack.c.l.b16 %v1158
    %v1361 = vunpack.c.h.b16 %v1158
    %v1362 = vunpack.c.l.b16 %v1159
    %v1363 = vunpack.c.h.b16 %v1159
    %v1364 = vunpack.c.l.b16 %v1160
    %v1365 = vunpack.c.h.b16 %v1160
    %v1366 = vunpack.c.l.b16 %v1161
    %v1367 = vunpack.c.h.b16 %v1161
    %v1368 = vunpack.c.l.b16 %v1162
    %v1369 = vunpack.c.h.b16 %v1162
    %v1370 = vunpack.c.l.b16 %v1163
    %v1371 = vunpack.c.h.b16 %v1163
    %v1372 = vunpack.c.l.b16 %v1164
    %v1373 = vunpack.c.h.b16 %v1164
    %v1374 = vunpack.c.l.b16 %v1165
    %v1375 = vunpack.c.h.b16 %v1165
    %v1376 = vunpack.c.l.b16 %v1166
    %v1377 = vunpack.c.h.b16 %v1166
    %v1378 = vunpack.c.l.b16 %v1167
    %v1379 = vunpack.c.h.b16 %v1167
    %v1380 = vunpack.c.l.b16 %v1168
    %v1381 = vunpack.c.h.b16 %v1168
    %v1382 = vunpack.c.l.b16 %v1169
    %v1383 = vunpack.c.h.b16 %v1169
    %v1384 = vunpack.c.l.b16 %v1170
    %v1385 = vunpack.c.h.b16 %v1170
    %v1386 = vunpack.c.l.b16 %v1171
    %v1387 = vunpack.c.h.b16 %v1171
    %v1388 = vunpack.c.l.b16 %v1172
    %v1389 = vunpack.c.h.b16 %v1172
    %v1390 = vunpack.c.l.b16 %v1173
    %v1391 = vunpack.c.h.b16 %v1173
    %v1392 = vunpack.c.l.b16 %v1174
    %v1393 = vunpack.c.h.b16 %v1174
    %v1394 = vunpack.c.l.b16 %v1175
    %v1395 = vunpack.c.h.b16 %v1175
    %v1396 = vunpack.c.l.b16 %v1176
    %v1397 = vunpack.c.h.b16 %v1176
    %v1398 = vunpack.c.l.b16 %v1177
    %v1399 = vunpack.c.h.b16 %v1177
    %v1400 = vunpack.c.l.b16 %v1178
    %v1401 = vunpack.c.h.b16 %v1178
    %v1402 = vunpack.c.l.b16 %v1179
    %v1403 = vunpack.c.h.b16 %v1179
    %v1404 = vunpack.c.l.b16 %v1180
    %v1405 = vunpack.c.h.b16 %v1180
    %v1406 = vunpack.c.l.b16 %v1181
    %v1407 = vunpack.c.h.b16 %v1181
    %v1408 = vunpack.c.l.b16 %v1182
    %v1409 = vunpack.c.h.b16 %v1182
    %v1410 = vunpack.c.l.b16 %v1183
    %v1411 = vunpack.c.h.b16 %v1183
    %v1412 = vunpack.c.l.b16 %v1184
    %v1413 = vunpack.c.h.b16 %v1184
    %v1414 = vunpack.c.l.b16 %v1185
    %v1415 = vunpack.c.h.b16 %v1185
    %v1416 = vunpack.c.l.b16 %v1186
    %v1417 = vunpack.c.h.b16 %v1186
    %v1418 = vunpack.c.l.b16 %v1187
    %v1419 = vunpack.c.h.b16 %v1187
    %v1420 = vunpack.c.l.b16 %v1188
    %v1421 = vunpack.c.h.b16 %v1188
    %v1422 = vunpack.c.l.b16 %v1189
    %v1423 = vunpack.c.h.b16 %v1189
    %v1424 = vunpack.c.l.b16 %v1190
    %v1425 = vunpack.c.h.b16 %v1190
    %v1426 = vunpack.c.l.b16 %v1191
    %v1427 = vunpack.c.h.b16 %v1191
    %v1428 = vunpack.c.l.b16 %v1192
    %v1429 = vunpack.c.h.b16 %v1192
    %v1430 = vunpack.c.l.b16 %v1193
    %v1431 = vunpack.c.h.b16 %v1193
    %v1432 = vunpack.c.l.b16 %v1194
    %v1433 = vunpack.c.h.b16 %v1194
    %v1434 = vunpack.c.l.b16 %v1195
    %v1435 = vunpack.c.h.b16 %v1195
    %v1436 = vunpack.c.l.b16 %v1196
    %v1437 = vunpack.c.h.b16 %v1196
    %v1438 = vunpack.c.l.b16 %v1197
    %v1439 = vunpack.c.h.b16 %v1197
    %v1440 = vunpack.c.l.b16 %v1198
    %v1441 = vunpack.c.h.b16 %v1198
    %v1442 = vunpack.c.l.b16 %v1199
    %v1443 = vunpack.c.h.b16 %v1199
    %v1444 = vunpack.c.l.b16 %v1200
    %v1445 = vunpack.c.h.b16 %v1200
    %v1446 = vunpack.c.l.b16 %v1201
    %v1447 = vunpack.c.h.b16 %v1201
    %v1448 = vunpack.c.l.b16 %v1202
    %v1449 = vunpack.c.h.b16 %v1202
    %v1450 = vunpack.c.l.b16 %v1203
    %v1451 = vunpack.c.h.b16 %v1203
    %v1452 = vunpack.c.l.b16 %v1204
    %v1453 = vunpack.c.h.b16 %v1204
    %v1454 = vunpack.c.l.b16 %v1205
    %v1455 = vunpack.c.h.b16 %v1205
    %v1456 = vunpack.c.l.b16 %v1206
    %v1457 = vunpack.c.h.b16 %v1206
    %v1458 = vunpack.c.l.b16 %v1207
    %v1459 = vunpack.c.h.b16 %v1207
    %v1460 = vunpack.c.l.b16 %v1208
    %v1461 = vunpack.c.h.b16 %v1208
    %v1462 = vunpack.c.l.b16 %v1209
    %v1463 = vunpack.c.h.b16 %v1209
    %v1464 = vunpack.c.l.b16 %v1210
    %v1465 = vunpack.c.h.b16 %v1210
    %v1466 = vunpack.c.l.b16 %v1211
    %v1467 = vunpack.c.h.b16 %v1211
    %v1468 = vunpack.c.l.b16 %v1212
    %v1469 = vunpack.c.h.b16 %v1212
    %v1470 = vunpack.c.l.b16 %v1213
    %v1471 = vunpack.c.h.b16 %v1213
    %v1472 = vunpack.c.l.b16 %v1214
    %v1473 = vunpack.c.h.b16 %v1214
    %v1474 = vunpack.c.l.b16 %v1215
    %v1475 = vunpack.c.h.b16 %v1215
    %v1476 = vunpack.c.l.b16 %v1216
    %v1477 = vunpack.c.h.b16 %v1216
    %v1478 = vunpack.c.l.b16 %v1217
    %v1479 = vunpack.c.h.b16 %v1217
    %v1480 = vunpack.c.l.b16 %v1218
    %v1481 = vunpack.c.h.b16 %v1218
    %v1482 = vunpack.c.l.b16 %v1219
    %v1483 = vunpack.c.h.b16 %v1219
    %v1484 = vunpack.c.l.b16 %v1220
    %v1485 = vunpack.c.h.b16 %v1220
    %v1486 = vunpack.c.l.b16 %v1221
    %v1487 = vunpack.c.h.b16 %v1221
    %v1488 = vunpack.c.l.b16 %v1222
    %v1489 = vunpack.c.h.b16 %v1222
    %v1490 = vunpack.c.l.b16 %v1223
    %v1491 = vunpack.c.h.b16 %v1223
    %v1492 = vunpack.c.l.b16 %v1224
    %v1493 = vunpack.c.h.b16 %v1224
    %v1494 = vunpack.c.l.b16 %v1225
    %v1495 = vunpack.c.h.b16 %v1225
    %v1496 = vunpack.c.l.b16 %v1226
    %v1497 = vunpack.c.h.b16 %v1226
    %v1498 = vunpack.c.l.b16 %v1227
    %v1499 = vunpack.c.h.b16 %v1227
    %v1500 = vunpack.c.l.b16 %v1228
    %v1501 = vunpack.c.h.b16 %v1228
    %v1502 = vunpack.c.l.b16 %v1229
    %v1503 = vunpack.c.h.b16 %v1229
    %v1504 = vunpack.c.l.b16 %v1230
    %v1505 = vunpack.c.h.b16 %v1230
    %v1506 = vunpack.c.l.b16 %v1231
    %v1507 = vunpack.c.h.b16 %v1231
    %v1508 = vunpack.c.l.b16 %v1232
    %v1509 = vunpack.c.h.b16 %v1232
    %v1510 = vunpack.c.l.b16 %v1233
    %v1511 = vunpack.c.h.b16 %v1233
    %v1512 = vunpack.c.l.b16 %v1234
    %v1513 = vunpack.c.h.b16 %v1234
    %v1514 = vunpack.c.l.b16 %v1235
    %v1515 = vunpack.c.h.b16 %v1235
    %v1516 = vunpack.c.l.b16 %v1236
    %v1517 = vunpack.c.h.b16 %v1236
    %v1518 = vunpack.c.l.b16 %v1237
    %v1519 = vunpack.c.h.b16 %v1237
    %v1520 = vunpack.c.l.b16 %v1238
    %v1521 = vunpack.c.h.b16 %v1238
    %v1522 = vunpack.c.l.b16 %v1239
    %v1523 = vunpack.c.h.b16 %v1239
    %v1524 = vunpack.c.l.b16 %v1240
    %v1525 = vunpack.c.h.b16 %v1240
    %v1526 = vunpack.c.l.b16 %v1241
    %v1527 = vunpack.c.h.b16 %v1241
    %v1528 = vunpack.c.l.b16 %v1242
    %v1529 = vunpack.c.h.b16 %v1242
    %v1530 = vunpack.c.l.b16 %v1243
    %v1531 = vunpack.c.h.b16 %v1243
    %v1532 = vpack.c.b16 %v1342, %v1340
    %v1533 = vpack.c.b16 %v1343, %v1341
    %v1534 = vpack.c.b16 %v1346, %v1344
    %v1535 = vpack.c.b16 %v1347, %v1345
    %v1536 = vpack.c.b16 %v1350, %v1348
    %v1537 = vpack.c.b16 %v1351, %v1349
    %v1538 = vpack.c.b16 %v1354, %v1352
    %v1539 = vpack.c.b16 %v1355, %v1353
    %v1540 = vpack.c.b16 %v1358, %v1356
    %v1541 = vpack.c.b16 %v1359, %v1357
    %v1542 = vpack.c.b16 %v1362, %v1360
    %v1543 = vpack.c.b16 %v1363, %v1361
    %v1544 = vpack.c.b16 %v1366, %v1364
    %v1545 = vpack.c.b16 %v1367, %v1365
    %v1546 = vpack.c.b16 %v1370, %v1368
    %v1547 = vpack.c.b16 %v1371, %v1369
    %v1548 = vpack.c.b16 %v1374, %v1372
    %v1549 = vpack.c.b16 %v1375, %v1373
    %v1550 = vpack.c.b16 %v1378, %v1376
    %v1551 = vpack.c.b16 %v1379, %v1377
    %v1552 = vpack.c.b16 %v1382, %v1380
    %v1553 = vpack.c.b16 %v1383, %v1381
    %v1554 = vpack.c.b16 %v1386, %v1384
    %v1555 = vpack.c.b16 %v1387, %v1385
    %v1556 = vpack.c.b16 %v1390, %v1388
    %v1557 = vpack.c.b16 %v1391, %v1389
    %v1558 = vpack.c.b16 %v1394, %v1392
    %v1559 = vpack.c.b16 %v1395, %v1393
    %v1560 = vpack.c.b16 %v1398, %v1396
    %v1561 = vpack.c.b16 %v1399, %v1397
    %v1562 = vpack.c.b16 %v1402, %v1400
    %v1563 = vpack.c.b16 %v1403, %v1401
    %v1564 = vpack.c.b16 %v1406, %v1404
    %v1565 = vpack.c.b16 %v1407, %v1405
    %v1566 = vpack.c.b16 %v1410, %v1408
    %v1567 = vpack.c.b16 %v1411, %v1409
    %v1568 = vpack.c.b16 %v1414, %v1412
    %v1569 = vpack.c.b16 %v1415, %v1413
    %v1570 = vpack.c.b16 %v1418, %v1416
    %v1571 = vpack.c.b16 %v1419, %v1417
    %v1572 = vpack.c.b16 %v1422, %v1420
    %v1573 = vpack.c.b16 %v1423, %v1421
    %v1574 = vpack.c.b16 %v1426, %v1424
    %v1575 = vpack.c.b16 %v1427, %v1425
    %v1576 = vpack.c.b16 %v1430, %v1428
    %v1577 = vpack.c.b16 %v1431, %v1429
    %v1578 = vpack.c.b16 %v1434, %v1432
    %v1579 = vpack.c.b16 %v1435, %v1433
    %v1580 = vpack.c.b16 %v1438, %v1436
    %v1581 = vpack.c.b16 %v1439, %v1437
    %v1582 = vpack.c.b16 %v1442, %v1440
    %v1583 = vpack.c.b16 %v1443, %v1441
    %v1584 = vpack.c.b16 %v1446, %v1444
    %v1585 = vpack.c.b16 %v1447, %v1445
    %v1586 = vpack.c.b16 %v1450, %v1448
    %v1587 = vpack.c.b16 %v1451, %v1449
    %v1588 = vpack.c.b16 %v1454, %v1452
    %v1589 = vpack.c.b16 %v1455, %v1453
    %v1590 = vpack.c.b16 %v1458, %v1456
    %v1591 = vpack.c.b16 %v1459, %v1457
    %v1592 = vpack.c.b16 %v1462, %v1460
    %v1593 = vpack.c.b16 %v1463, %v1461
    %v1594 = vpack.c.b16 %v1466, %v1464
    %v1595 = vpack.c.b16 %v1467, %v1465
    %v1596 = vpack.c.b16 %v1470, %v1468
    %v1597 = vpack.c.b16 %v1471, %v1469
    %v1598 = vpack.c.b16 %v1474, %v1472
    %v1599 = vpack.c.b16 %v1475, %v1473
    %v1600 = vpack.c.b16 %v1478, %v1476
    %v1601 = vpack.c.b16 %v1479, %v1477
    %v1602 = vpack.c.b16 %v1482, %v1480
    %v1603 = vpack.c.b16 %v1483, %v1481
    %v1604 = vpack.c.b16 %v1486, %v1484
    %v1605 = vpack.c.b16 %v1487, %v1485
    %v1606 = vpack.c.b16 %v1490, %v1488
    %v1607 = vpack.c.b16 %v1491, %v1489
    %v1608 = vpack.c.b16 %v1494, %v1492
    %v1609 = vpack.c.b16 %v1495, %v1493
    %v1610 = vpack.c.b16 %v1498, %v1496
    %v1611 = vpack.c.b16 %v1499, %v1497
    %v1612 = vpack.c.b16 %v1502, %v1500
    %v1613 = vpack.c.b16 %v1503, %v1501
    %v1614 = vpack.c.b16 %v1506, %v1504
    %v1615 = vpack.c.b16 %v1507, %v1505
    %v1616 = vpack.c.b16 %v1510, %v1508
    %v1617 = vpack.c.b16 %v1511, %v1509
    %v1618 = vpack.c.b16 %v1514, %v1512
    %v1619 = vpack.c.b16 %v1515, %v1513
    %v1620 = vpack.c.b16 %v1518, %v1516
    %v1621 = vpack.c.b16 %v1519, %v1517
    %v1622 = vpack.c.b16 %v1522, %v1520
    %v1623 = vpack.c.b16 %v1523, %v1521
    %v1624 = vpack.c.b16 %v1526, %v1524
    %v1625 = vpack.c.b16 %v1527, %v1525
    %v1626 = vpack.c.b16 %v1530, %v1528
    %v1627 = vpack.c.b16 %v1531, %v1529
    %1724 = vmatprep.subr.bf16.mxu0 %v1533
    %1725 = vmatpush1.bf16.msra.mxu0 %v1532
    %1726 = vmatprep.subr.bf16.mxu0 %v1535
    %1727 = vmatpush1.bf16.msra.mxu0 %v1534
    %1728 = vmatprep.subr.bf16.mxu0 %v1537
    %1729 = vmatpush1.bf16.msra.mxu0 %v1536
    %1730 = vmatprep.subr.bf16.mxu0 %v1539
    %1731 = vmatpush1.bf16.msra.mxu0 %v1538
    %1732 = vmatprep.subr.bf16.mxu0 %v1541
    %1733 = vmatpush1.bf16.msra.mxu0 %v1540
    %1734 = vmatprep.subr.bf16.mxu0 %v1543
    %1735 = vmatpush1.bf16.msra.mxu0 %v1542
    %1736 = vmatprep.subr.bf16.mxu0 %v1545
    %1737 = vmatpush1.bf16.msra.mxu0 %v1544
    %1738 = vmatprep.subr.bf16.mxu0 %v1547
    %1739 = vmatpush1.bf16.msra.mxu0 %v1546
    %1740 = vmatprep.subr.bf16.mxu0 %v1549
    %1741 = vmatpush1.bf16.msra.mxu0 %v1548
    %1742 = vmatprep.subr.bf16.mxu0 %v1551
    %1743 = vmatpush1.bf16.msra.mxu0 %v1550
    %1744 = vmatprep.subr.bf16.mxu0 %v1553
    %1745 = vmatpush1.bf16.msra.mxu0 %v1552
    %1746 = vmatprep.subr.bf16.mxu0 %v1555
    %1747 = vmatpush1.bf16.msra.mxu0 %v1554
    %1748 = vmatprep.subr.bf16.mxu0 %v1557
    %1749 = vmatpush1.bf16.msra.mxu0 %v1556
    %1750 = vmatprep.subr.bf16.mxu0 %v1559
    %1751 = vmatpush1.bf16.msra.mxu0 %v1558
    %1752 = vmatprep.subr.bf16.mxu0 %v1561
    %1753 = vmatpush1.bf16.msra.mxu0 %v1560
    %1754 = vmatprep.subr.bf16.mxu0 %v1563
    %1755 = vmatpush1.bf16.msra.mxu0 %v1562
    %1756 = vmatprep.mubr.bf16.mxu0 %v1143
    %1757 = vmatmul.mubr.bf16.gmra.mrb[0].mxu0 %v1142
    %v1758 = vpop.f32.mrb[0].mxu0
    %v1759 = vadd.f32 0.0, %v1758
    %v1760 = vpop.f32.mrb[0].mxu0
    %v1761 = vadd.f32 0.0, %v1760
    %v1762 = vpop.f32.mrb[0].mxu0
    %v1763 = vadd.f32 0.0, %v1762
    %v1764 = vpop.f32.mrb[0].mxu0
    %v1765 = vadd.f32 0.0, %v1764
    %1766 = vdwg.mxu0
    %1767 = vmatprep.subr.bf16.mxu0 %v1565
    %1768 = vmatpush1.bf16.msra.mxu0 %v1564
    %1769 = vmatprep.subr.bf16.mxu0 %v1567
    %1770 = vmatpush1.bf16.msra.mxu0 %v1566
    %1771 = vmatprep.subr.bf16.mxu0 %v1569
    %1772 = vmatpush1.bf16.msra.mxu0 %v1568
    %1773 = vmatprep.subr.bf16.mxu0 %v1571
    %1774 = vmatpush1.bf16.msra.mxu0 %v1570
    %1775 = vmatprep.subr.bf16.mxu0 %v1573
    %1776 = vmatpush1.bf16.msra.mxu0 %v1572
    %1777 = vmatprep.subr.bf16.mxu0 %v1575
    %1778 = vmatpush1.bf16.msra.mxu0 %v1574
    %1779 = vmatprep.subr.bf16.mxu0 %v1577
    %1780 = vmatpush1.bf16.msra.mxu0 %v1576
    %1781 = vmatprep.subr.bf16.mxu0 %v1579
    %1782 = vmatpush1.bf16.msra.mxu0 %v1578
    %1783 = vmatprep.subr.bf16.mxu0 %v1581
    %1784 = vmatpush1.bf16.msra.mxu0 %v1580
    %1785 = vmatprep.subr.bf16.mxu0 %v1583
    %1786 = vmatpush1.bf16.msra.mxu0 %v1582
    %1787 = vmatprep.subr.bf16.mxu0 %v1585
    %1788 = vmatpush1.bf16.msra.mxu0 %v1584
    %1789 = vmatprep.subr.bf16.mxu0 %v1587
    %1790 = vmatpush1.bf16.msra.mxu0 %v1586
    %1791 = vmatprep.subr.bf16.mxu0 %v1589
    %1792 = vmatpush1.bf16.msra.mxu0 %v1588
    %1793 = vmatprep.subr.bf16.mxu0 %v1591
    %1794 = vmatpush1.bf16.msra.mxu0 %v1590
    %1795 = vmatprep.subr.bf16.mxu0 %v1593
    %1796 = vmatpush1.bf16.msra.mxu0 %v1592
    %1797 = vmatprep.subr.bf16.mxu0 %v1595
    %1798 = vmatpush1.bf16.msra.mxu0 %v1594
    %1799 = vmatprep.mubr.bf16.mxu0 %v1145
    %1800 = vmatmul.mubr.bf16.gmra.mrb[0].mxu0 %v1144
    %v1801 = vpop.f32.mrb[0].mxu0
    %v1802 = vadd.f32 %v1759, %v1801
    %v1803 = vpop.f32.mrb[0].mxu0
    %v1804 = vadd.f32 %v1761, %v1803
    %v1805 = vpop.f32.mrb[0].mxu0
    %v1806 = vadd.f32 %v1763, %v1805
    %v1807 = vpop.f32.mrb[0].mxu0
    %v1808 = vadd.f32 %v1765, %v1807
    %1809 = vdwg.mxu0
    %1810 = vmatprep.subr.bf16.mxu0 %v1597
    %1811 = vmatpush1.bf16.msra.mxu0 %v1596
    %1812 = vmatprep.subr.bf16.mxu0 %v1599
    %1813 = vmatpush1.bf16.msra.mxu0 %v1598
    %1814 = vmatprep.subr.bf16.mxu0 %v1601
    %1815 = vmatpush1.bf16.msra.mxu0 %v1600
    %1816 = vmatprep.subr.bf16.mxu0 %v1603
    %1817 = vmatpush1.bf16.msra.mxu0 %v1602
    %1818 = vmatprep.subr.bf16.mxu0 %v1605
    %1819 = vmatpush1.bf16.msra.mxu0 %v1604
    %1820 = vmatprep.subr.bf16.mxu0 %v1607
    %1821 = vmatpush1.bf16.msra.mxu0 %v1606
    %1822 = vmatprep.subr.bf16.mxu0 %v1609
    %1823 = vmatpush1.bf16.msra.mxu0 %v1608
    %1824 = vmatprep.subr.bf16.mxu0 %v1611
    %1825 = vmatpush1.bf16.msra.mxu0 %v1610
    %1826 = vmatprep.subr.bf16.mxu0 %v1613
    %1827 = vmatpush1.bf16.msra.mxu0 %v1612
    %1828 = vmatprep.subr.bf16.mxu0 %v1615
    %1829 = vmatpush1.bf16.msra.mxu0 %v1614
    %1830 = vmatprep.subr.bf16.mxu0 %v1617
    %1831 = vmatpush1.bf16.msra.mxu0 %v1616
    %1832 = vmatprep.subr.bf16.mxu0 %v1619
    %1833 = vmatpush1.bf16.msra.mxu0 %v1618
    %1834 = vmatprep.subr.bf16.mxu0 %v1621
    %1835 = vmatpush1.bf16.msra.mxu0 %v1620
    %1836 = vmatprep.subr.bf16.mxu0 %v1623
    %1837 = vmatpush1.bf16.msra.mxu0 %v1622
    %1838 = vmatprep.subr.bf16.mxu0 %v1625
    %1839 = vmatpush1.bf16.msra.mxu0 %v1624
    %1840 = vmatprep.subr.bf16.mxu0 %v1627
    %1841 = vmatpush1.bf16.msra.mxu0 %v1626
    %1842 = vmatprep.mubr.bf16.mxu0 %v1147
    %1843 = vmatmul.mubr.bf16.gmra.mrb[0].mxu0 %v1146
    %v1844 = vpop.f32.mrb[0].mxu0
    %v1845 = vadd.f32 %v1802, %v1844
    %v1846 = vpop.f32.mrb[0].mxu0
    %v1847 = vadd.f32 %v1804, %v1846
    %v1848 = vpop.f32.mrb[0].mxu0
    %v1849 = vadd.f32 %v1806, %v1848
    %v1850 = vpop.f32.mrb[0].mxu0
    %v1851 = vadd.f32 %v1808, %v1850
    %1852 = vdwg.mxu0
    %v1853 = vadd.f32 %v1845, %v1849
    %v1854 = vrot.slane %v1853, 4
    %v1855 = vadd.f32 %v1853, %v1854
    %v1856 = vrot.slane %v1855, 2
    %v1857 = vadd.f32 %v1855, %v1856
    %v1858 = vrot.slane %v1857, 1
    %v1859 = vadd.f32 %v1857, %v1858
    %v1860 = vadd.f32 %v1847, %v1851
    %v1861 = vrot.slane %v1860, 4
    %v1862 = vadd.f32 %v1860, %v1861
    %v1863 = vrot.slane %v1862, 2
    %v1864 = vadd.f32 %v1862, %v1863
    %v1865 = vrot.slane %v1864, 1
    %v1866 = vadd.f32 %v1864, %v1865
    %v1867 = vmul.f32 %v1845, %v1845
    %v1868 = vmul.f32 %v1847, %v1847
    %v1869 = vmul.f32 %v1849, %v1849
    %v1870 = vmul.f32 %v1851, %v1851
    %v1871 = vadd.f32 %v1867, %v1869
    %v1872 = vrot.slane %v1871, 4
    %v1873 = vadd.f32 %v1871, %v1872
    %v1874 = vrot.slane %v1873, 2
    %v1875 = vadd.f32 %v1873, %v1874
    %v1876 = vrot.slane %v1875, 1
    %v1877 = vadd.f32 %v1875, %v1876
    %v1878 = vadd.f32 %v1868, %v1870
    %v1879 = vrot.slane %v1878, 4
    %v1880 = vadd.f32 %v1878, %v1879
    %v1881 = vrot.slane %v1880, 2
    %v1882 = vadd.f32 %v1880, %v1881
    %v1883 = vrot.slane %v1882, 1
    %v1884 = vadd.f32 %v1882, %v1883
    %v1885 = vsel %vm865, %v1859, %v1877
    %v1886 = vsel %vm865, %v1866, %v1884
    %1887 = vmatprep.subr.mxu0 0.0
    %1888 = vmatpush1.msra.mxu0 %v868
    %1889 = vmatprep.subr.mxu0 0.0
    %1890 = vmatpush1.msra.mxu0 %v869
    %1891 = vmatprep.subr.mxu0 0.0
    %1892 = vmatpush1.msra.mxu0 %v870
    %1893 = vmatprep.subr.mxu0 0.0
    %1894 = vmatpush1.msra.mxu0 %v871
    %1895 = vmatprep.subr.mxu0 0.0
    %1896 = vmatpush1.msra.mxu0 %v872
    %1897 = vmatprep.subr.mxu0 0.0
    %1898 = vmatpush1.msra.mxu0 %v873
    %1899 = vmatprep.subr.mxu0 0.0
    %1900 = vmatpush1.msra.mxu0 %v874
    %1901 = vmatprep.subr.mxu0 0.0
    %1902 = vmatpush1.msra.mxu0 %v875
    %1903 = vmatprep.subr.mxu0 0.0
    %1904 = vmatpush1.msra.mxu0 %v876
    %1905 = vmatprep.subr.mxu0 0.0
    %1906 = vmatpush1.msra.mxu0 %v877
    %1907 = vmatprep.subr.mxu0 0.0
    %1908 = vmatpush1.msra.mxu0 %v878
    %1909 = vmatprep.subr.mxu0 0.0
    %1910 = vmatpush1.msra.mxu0 %v879
    %1911 = vmatprep.subr.mxu0 0.0
    %1912 = vmatpush1.msra.mxu0 %v880
    %1913 = vmatprep.subr.mxu0 0.0
    %1914 = vmatpush1.msra.mxu0 %v881
    %1915 = vmatprep.subr.mxu0 0.0
    %1916 = vmatpush1.msra.mxu0 %v882
    %1917 = vmatprep.subr.mxu0 0.0
    %1918 = vmatpush1.msra.mxu0 %v883
    %1919 = vmatprep.subr.mxu0 0.0
    %1920 = vmatpush1.msra.mxu0 %v884
    %1921 = vmatprep.subr.mxu0 0.0
    %1922 = vmatpush1.msra.mxu0 %v885
    %1923 = vmatprep.subr.mxu0 0.0
    %1924 = vmatpush1.msra.mxu0 %v886
    %1925 = vmatprep.subr.mxu0 0.0
    %1926 = vmatpush1.msra.mxu0 %v887
    %1927 = vmatprep.subr.mxu0 0.0
    %1928 = vmatpush1.msra.mxu0 %v888
    %1929 = vmatprep.subr.mxu0 0.0
    %1930 = vmatpush1.msra.mxu0 %v889
    %1931 = vmatprep.subr.mxu0 0.0
    %1932 = vmatpush1.msra.mxu0 %v890
    %1933 = vmatprep.subr.mxu0 0.0
    %1934 = vmatpush1.msra.mxu0 %v891
    %1935 = vmatprep.subr.mxu0 0.0
    %1936 = vmatpush1.msra.mxu0 %v892
    %1937 = vmatprep.subr.mxu0 0.0
    %1938 = vmatpush1.msra.mxu0 %v893
    %1939 = vmatprep.subr.mxu0 0.0
    %1940 = vmatpush1.msra.mxu0 %v894
    %1941 = vmatprep.subr.mxu0 0.0
    %1942 = vmatpush1.msra.mxu0 %v895
    %1943 = vmatprep.subr.mxu0 0.0
    %1944 = vmatpush1.msra.mxu0 %v896
    %1945 = vmatprep.subr.mxu0 0.0
    %1946 = vmatpush1.msra.mxu0 %v897
    %1947 = vmatprep.subr.mxu0 0.0
    %1948 = vmatpush1.msra.mxu0 %v898
    %1949 = vmatprep.subr.mxu0 0.0
    %1950 = vmatpush1.msra.mxu0 %v899
    %1951 = vmatprep.mubr.f32.mxu0 %v1886
    %1952 = vmatmul.mubr.f32.gmra.mrb[0].mxu0 %v1885
    %v1953 = vpop.f32.mrb[0].mxu0
    %v1954 = vadd.f32 0.0, %v1953
    %v1955 = vpop.f32.mrb[0].mxu0
    %1956 = vdwg.mxu0
    %v1957 = vmul.f32 %v1954, 0.0009765625
    %v1958 = vmul.f32 %v1957, %v1957
    %v1960 = vrot.slane %v1958, 7
    %v1962 = vsub.f32 %v1957, %v1960
    %v1963 = vld [vmem:[%s5] sm:$0x1]
    %v1964 = vadd.f32 %v1962, 1e-05
    %v1965 = vrsqrt.pop %v1964
    %v1968 = vunpack.c.l.s4 1966171168
    %v1969 = vunpack.c.0.s8 %v1968
    %v1970 = vlaneseq
    %v1971 = vshrl.u32 %v1970, 7
    %v1972 = vsub.s32 %v1969, %v1971
    %v1973 = vrot.slane %v1965, %v1972
    %v1974 = vcombine.high %v1973, %v1973
    %v1976 = vunpack.c.l.s4 1966171168
    %v1977 = vunpack.c.0.s8 %v1976
    %v1978 = vlaneseq
    %v1979 = vshrl.u32 %v1978, 7
    %v1980 = vsub.s32 %v1977, %v1979
    %v1981 = vrot.slane %v1974, %v1980
    %v1983 = vmul.f32 %v1963, %v1981
    %v1984 = vld [vmem:[%s6] sm:$0x1]
    %v1985 = vmul.f32 %v1957, %v1983
    %v1986 = vsub.f32 %v1984, %v1985
    %v1988 = vlaneseq
    %v1989 = vshrl.u32 %v1988, 7
    %v1990 = vsub.s32 0, %v1989
    %v1991 = vrot.slane %v1986, %v1990
    %v1993 = vsel %vm865, %v1983, %v1991
    %v1995 = vsel %vm1010, %v1993, 0
    %1997 = vmatprep.subr.mxu0 %v1017
    %1998 = vmatpush1.msra.mxu0 %v1015
    %1999 = vmatprep.subr.mxu0 0.0
    %2000 = vmatpush1.msra.mxu0 0.0
    %2001 = vmatprep.subr.mxu0 0.0
    %2002 = vmatpush1.msra.mxu0 0.0
    %2003 = vmatprep.subr.mxu0 0.0
    %2004 = vmatpush1.msra.mxu0 0.0
    %2005 = vmatprep.subr.mxu0 0.0
    %2006 = vmatpush1.msra.mxu0 0.0
    %2007 = vmatprep.subr.mxu0 0.0
    %2008 = vmatpush1.msra.mxu0 0.0
    %2009 = vmatprep.subr.mxu0 0.0
    %2010 = vmatpush1.msra.mxu0 0.0
    %2011 = vmatprep.subr.mxu0 0.0
    %2012 = vmatpush1.msra.mxu0 0.0
    %2013 = vmatprep.subr.mxu0 0.0
    %2014 = vmatpush1.msra.mxu0 0.0
    %2015 = vmatprep.subr.mxu0 0.0
    %2016 = vmatpush1.msra.mxu0 0.0
    %2017 = vmatprep.subr.mxu0 0.0
    %2018 = vmatpush1.msra.mxu0 0.0
    %2019 = vmatprep.subr.mxu0 0.0
    %2020 = vmatpush1.msra.mxu0 0.0
    %2021 = vmatprep.subr.mxu0 0.0
    %2022 = vmatpush1.msra.mxu0 0.0
    %2023 = vmatprep.subr.mxu0 0.0
    %2024 = vmatpush1.msra.mxu0 0.0
    %2025 = vmatprep.subr.mxu0 0.0
    %2026 = vmatpush1.msra.mxu0 0.0
    %2027 = vmatprep.subr.mxu0 0.0
    %2028 = vmatpush1.msra.mxu0 0.0
    %2029 = vmatprep.subr.mxu0 0.0
    %2030 = vmatpush1.msra.mxu0 0.0
    %2031 = vmatprep.subr.mxu0 0.0
    %2032 = vmatpush1.msra.mxu0 0.0
    %2033 = vmatprep.subr.mxu0 0.0
    %2034 = vmatpush1.msra.mxu0 0.0
    %2035 = vmatprep.subr.mxu0 0.0
    %2036 = vmatpush1.msra.mxu0 0.0
    %2037 = vmatprep.subr.mxu0 0.0
    %2038 = vmatpush1.msra.mxu0 0.0
    %2039 = vmatprep.subr.mxu0 0.0
    %2040 = vmatpush1.msra.mxu0 0.0
    %2041 = vmatprep.subr.mxu0 0.0
    %2042 = vmatpush1.msra.mxu0 0.0
    %2043 = vmatprep.subr.mxu0 0.0
    %2044 = vmatpush1.msra.mxu0 0.0
    %2045 = vmatprep.subr.mxu0 0.0
    %2046 = vmatpush1.msra.mxu0 0.0
    %2047 = vmatprep.subr.mxu0 0.0
    %2048 = vmatpush1.msra.mxu0 0.0
    %2049 = vmatprep.subr.mxu0 0.0
    %2050 = vmatpush1.msra.mxu0 0.0
    %2051 = vmatprep.subr.mxu0 0.0
    %2052 = vmatpush1.msra.mxu0 0.0
    %2053 = vmatprep.subr.mxu0 0.0
    %2054 = vmatpush1.msra.mxu0 0.0
    %2055 = vmatprep.subr.mxu0 0.0
    %2056 = vmatpush1.msra.mxu0 0.0
    %2057 = vmatprep.subr.mxu0 0.0
    %2058 = vmatpush1.msra.mxu0 0.0
    %2059 = vmatprep.subr.mxu0 0.0
    %2060 = vmatpush1.msra.mxu0 0.0
    %2061 = vmatprep.mubr.f32.mxu0 0.0
    %2062 = vmatmul.mubr.f32.gmra.mrb[0].mxu0 %v1995
    %v2063 = vpop.f32.mrb[0].mxu0
    %v2064 = vadd.f32 0.0, %v2063
    %v2065 = vpop.f32.mrb[0].mxu0
    %v2066 = vadd.f32 0.0, %v2065
    %2067 = vdwg.mxu0
    %v2068 = vlaneseq
    %v2069 = vshrl.u32 %v2068, 7
    %v2070 = vsub.s32 0, %v2069
    %v2071 = vrot.slane %v2064, %v2070
    %v2072 = vlaneseq
    %v2073 = vshrl.u32 %v2072, 7
    %v2074 = vsub.s32 0, %v2073
    %v2075 = vrot.slane %v2066, %v2074
    %v2076 = vmul.f32 %v1845, %v2071
    %v2077 = vmul.f32 %v1847, %v2075
    %v2078 = vmul.f32 %v1849, %v2071
    %v2079 = vmul.f32 %v1851, %v2075
    %v2080 = vlaneseq
    %v2081 = vshrl.u32 %v2080, 7
    %v2082 = vsub.s32 1, %v2081
    %v2083 = vrot.slane %v2064, %v2082
    %v2084 = vlaneseq
    %v2085 = vshrl.u32 %v2084, 7
    %v2086 = vsub.s32 1, %v2085
    %v2087 = vrot.slane %v2066, %v2086
    %v2088 = vadd.f32 %v2076, %v2083
    %v2089 = vadd.f32 %v2077, %v2087
    %v2090 = vadd.f32 %v2078, %v2083
    %v2091 = vadd.f32 %v2079, %v2087
    %v2092 = vmax.f32 %v2088, 0.0
    %v2093 = vmax.f32 %v2089, 0.0
    %v2094 = vmax.f32 %v2090, 0.0
    %v2095 = vmax.f32 %v2091, 0.0
    %v2096 = vadd.f32 %v2092, %v61
    %v2097 = vadd.f32 %v2093, %v62
    %v2098 = vadd.f32 %v2094, %v63
    %v2099 = vadd.f32 %v2095, %v64
    %2100 = vst [vmem:[#allocation7] sm:$0xff] %v2096
    %2101 = vst [vmem:[#allocation7 + $0x8] sm:$0xff] %v2097
    %2102 = vst [vmem:[#allocation7 + $0x10] sm:$0xff] %v2098
    %2103 = vst [vmem:[#allocation7 + $0x18] sm:$0xff] %v2099
    // Predicated region
    $region46: #{_deblock_call.1} parent=1 // pred_check
      _
    $region47: #{_deblock_call.1} parent=1 // pred_check_branch
      %2105 = sbr.rel (0) target = $region49
    $region48: #{_deblock_call.1} parent=1 // pred_region
      %s2107 = ssub.s32 512, 512
      %2108 = vsyncadd [#allocation4], %s2107
      %s2109 = sshll.u32 [#allocation7], 4
      %s2110 = int_to_ptr.vmem [resolvable:$true] %s2109
      %2115 = dma.vmem_to_hbm [thread:$0]  %s2110, 512, %s9, [#allocation4], 256, 256, 16
    $region49: #{_deblock_call.1} parent=1 // pred_fallthru
      _
    // Predicated region
    $region50: #{_deblock_call.1} parent=1 // pred_check
      _
    $region51: #{_deblock_call.1} parent=1 // pred_check_branch
      %2117 = sbr.rel (0) target = $region53
    $region52: #{_deblock_call.1} parent=1 // pred_region
      %2118 = dma.done [#allocation4], 512
    $region53: #{_deblock_call.1} parent=1 // pred_fallthru
      _
    %2119 = vsyncpa [#allocation3], 1
    %2120 = vsyncpa [#allocation6], 1
    %2121 = vsyncpa [#allocation4], 1

</llo_original>
